<compile_context>
chip_gen: v6e
topology: v6e:2x2x1
jax: 0.10.0
libtpu: 0.0.40
codegen_flags: <defaults>
</compile_context>

<pallas_src>
import numpy as np

import jax
import jax.numpy as jnp
from jax.experimental import pallas as pl
from jax.experimental.pallas import tpu as pltpu


IMG_BLOCK = 32   # images per grid step (conv1 matmul M = 7*IMG_BLOCK = 224)


# ----------------------------------------------------------------------------
# The fused forward kernel (one image block per grid step)
# ----------------------------------------------------------------------------
def _net_kernel(x5_ref, w1_ref, b1_ref, w2_ref, b2_ref,
                wf1_ref, bf1_ref, wf2_ref, bf2_ref, wf3_ref, bf3_ref,
                out_ref, p1e_s, p1o_s):
    f32, bf16 = jnp.float32, jnp.bfloat16
    NB = out_ref.shape[0]            # images in this block
    nr2 = 5 * NB                     # pooled conv2 rows per vertical parity

    # ---- conv1 + bias + ReLU + pool1 -----------------------------------------
    # x5_ref[g] holds the im2col rows for conv1 output rows h = 4*t + g, ordered
    # (t, image).  w1 columns are [even-w | pad | odd-w | pad] (2x128), so
    # vertical pool = max of row-groups, horizontal pool = max of 128-halves.
    w1 = w1_ref[...]
    b1 = b1_ref[...]

    def conv1_rows(g):
        return jnp.maximum(
            jnp.dot(x5_ref[g], w1, preferred_element_type=f32) + b1, 0.0)

    v1e = jnp.maximum(conv1_rows(0), conv1_rows(1))            # pool rows ph = 2t
    p1e_s[...] = jnp.maximum(v1e[:, :128], v1e[:, 128:])       # (7*NB, 128)
    v1o = jnp.maximum(conv1_rows(2), conv1_rows(3))            # pool rows ph = 2t+1
    p1o_s[...] = jnp.maximum(v1o[:, :128], v1o[:, 128:])       # (7*NB, 128)

    # ---- conv2 + bias + ReLU (banded over the 5 vertical taps) ----------------
    # Output rows are produced grouped by h2 parity and ordered (qh, image), so
    # every tap reads a contiguous NB-aligned window of p1e/p1o, and pool2's
    # vertical half is again a plain elementwise max of the two parity blocks.
    b2 = b2_ref[...]
    even_taps = ((p1e_s, 0), (p1o_s, 0), (p1e_s, 1), (p1o_s, 1), (p1e_s, 2))
    odd_taps  = ((p1o_s, 0), (p1e_s, 1), (p1o_s, 1), (p1e_s, 2), (p1o_s, 2))

    def conv2_rows(taps):
        acc = None
        for i, (src, off) in enumerate(taps):
            t = jnp.dot(src[off * NB:off * NB + nr2, :].astype(bf16), w2_ref[i],
                        preferred_element_type=f32)
            acc = t if acc is None else acc + t
        return jnp.maximum(acc + b2, 0.0)

    c2e = conv2_rows(even_taps)                                # rows h2 = 2*qh
    c2o = conv2_rows(odd_taps)                                 # rows h2 = 2*qh + 1
    vert = jnp.maximum(c2e, c2o)                               # (5*NB, 256)
    pooled = jnp.maximum(vert[:, :128], vert[:, 128:])         # (5*NB, 128), rows (qh, img)

    # ---- fc1 / fc2 / fc3, batched across the whole image block ----------------
    acc = bf1_ref[...]                                         # (1, 128) bias
    for qh in range(5):
        acc = acc + jnp.dot(pooled[qh * NB:(qh + 1) * NB, :].astype(bf16),
                            wf1_ref[qh], preferred_element_type=f32)
    h1 = jnp.maximum(acc, 0.0).astype(bf16)                    # (NB, 128); cols >=120 are 0
    h2 = jnp.maximum(jnp.dot(h1, wf2_ref[...], preferred_element_type=f32)
                     + bf2_ref[...], 0.0).astype(bf16)         # (NB, 128); cols >=84 are 0
    out_ref[...] = (jnp.dot(h2, wf3_ref[...], preferred_element_type=f32)
                    + bf3_ref[...])                            # logits in cols 0..9


# ----------------------------------------------------------------------------
# Wrapper: tiny input-side row-im2col + one pallas_call with a batch grid
# ----------------------------------------------------------------------------
@jax.jit
def net_forward(x_nchw, prep):
    """x_nchw: (B, 3, 32, 32) float32 -> logits (B, 10)."""
    x = x_nchw.astype(jnp.float32)
    B = x.shape[0]
    assert x.shape[1:] == (3, 32, 32), x.shape   # 32x32x3 forced by the 16*5*5 flatten

    NB = min(B, IMG_BLOCK)
    B_pad = ((B + NB - 1) // NB) * NB
    if B_pad != B:
        x = jnp.concatenate(
            [x, jnp.zeros((B_pad - B,) + x.shape[1:], x.dtype)], axis=0)
    G = B_pad // NB

    # Row-im2col for conv1: 5 vertically shifted copies on the lane axis
    # (col = i*96 + w*3 + ci), rows regrouped by (h mod 4) and ordered
    # (group, block, t, image) so both halves of pool1 are aligned maxes.
    x2d = jnp.transpose(x, (0, 2, 3, 1)).reshape(B_pad, 32, 96)
    taps = jnp.concatenate([x2d[:, i:i + 28, :] for i in range(5)], axis=2)   # (B_pad, 28, 480)
    x5 = (taps.reshape(G, NB, 7, 4, 480)
              .transpose(3, 0, 2, 1, 4)
              .reshape(4, G * 7 * NB, 480)
              .astype(jnp.bfloat16))

    names = ("w1", "b1", "w2", "b2", "wf1", "bf1", "wf2", "bf2", "wf3", "bf3")
    params = [prep[n] for n in names]

    def resident(shape):
        # whole array, same block every grid step -> stays VMEM-resident
        if len(shape) == 2:
            return pl.BlockSpec(shape, lambda g: (0, 0))
        return pl.BlockSpec(shape, lambda g: (0, 0, 0))

    in_specs = ([pl.BlockSpec((4, 7 * NB, 480), lambda g: (0, g, 0))]
                + [resident(p.shape) for p in params])

    flops = B_pad * (2 * 28 * 480 * 256                       # conv1
                     + 2 * 2 * 5 * 5 * 128 * 256              # conv2 (2 parities x 5 taps)
                     + 2 * (5 * 128 * 128 + 128 * 128 + 128 * 128))   # fc tail
    bytes_accessed = (x5.size * 2
                      + sum(p.size * p.dtype.itemsize for p in params)
                      + B_pad * 128 * 4)

    out = pl.pallas_call(
        _net_kernel,
        out_shape=jax.ShapeDtypeStruct((B_pad, 128), jnp.float32),
        grid_spec=pltpu.PrefetchScalarGridSpec(
            num_scalar_prefetch=0,
            grid=(G,),
            in_specs=in_specs,
            out_specs=pl.BlockSpec((NB, 128), lambda g: (g, 0)),
            scratch_shapes=[pltpu.VMEM((7 * NB, 128), jnp.float32),   # pooled conv1, even ph
                            pltpu.VMEM((7 * NB, 128), jnp.float32)],  # pooled conv1, odd ph
        ),
        compiler_params=pltpu.CompilerParams(dimension_semantics=("parallel",)),
        cost_estimate=pl.CostEstimate(flops=flops, transcendentals=0,
                                      bytes_accessed=bytes_accessed),
    )(x5, *params)

    return out[:B, :10]


# ----------------------------------------------------------------------------
# Parameters: PyTorch-style init + one-time preparation (outside jit)
# ----------------------------------------------------------------------------
def init_params(key):
    """uniform(-1/sqrt(fan_in), 1/sqrt(fan_in)), PyTorch layouts."""
    def u(k, shape, fan_in):
        bound = float(1.0 / np.sqrt(fan_in))
        return jax.random.uniform(k, shape, jnp.float32, -bound, bound)

    ks = jax.random.split(key, 10)
    return {
        "conv1_w": u(ks[0], (6, 3, 5, 5), 75),
        "conv1_b": u(ks[1], (6,), 75),
        "conv2_w": u(ks[2], (16, 6, 5, 5), 150),
        "conv2_b": u(ks[3], (16,), 150),
        "fc1_w":   u(ks[4], (120, 400), 400),    # torch Linear: (out, in)
        "fc1_b":   u(ks[5], (120,), 400),
        "fc2_w":   u(ks[6], (84, 120), 120),
        "fc2_b":   u(ks[7], (84,), 120),
        "fc3_w":   u(ks[8], (10, 84), 84),
        "fc3_b":   u(ks[9], (10,), 84),
    }


def prepare_params(raw):
    """One-time (outside jit) conversion of PyTorch-layout params into the
    banded / even-odd / 128-padded bf16 matrices consumed by the fused kernel."""
    w1 = np.asarray(raw["conv1_w"], np.float32)
    b1 = np.asarray(raw["conv1_b"], np.float32)
    w2 = np.asarray(raw["conv2_w"], np.float32)
    b2 = np.asarray(raw["conv2_b"], np.float32)
    fw1 = np.asarray(raw["fc1_w"], np.float32)
    fb1 = np.asarray(raw["fc1_b"], np.float32)
    fw2 = np.asarray(raw["fc2_w"], np.float32)
    fb2 = np.asarray(raw["fc2_b"], np.float32)
    fw3 = np.asarray(raw["fc3_w"], np.float32)
    fb3 = np.asarray(raw["fc3_b"], np.float32)

    # conv1 banded weight (480, 256): rows k = i*96 + (wo+j)*3 + ci,
    # output col = half*128 + co*14 + pw with wo = 2*pw + half.
    wbig1 = np.zeros((480, 256), np.float32)
    b1row = np.zeros((1, 256), np.float32)
    for co in range(6):
        for pw in range(14):
            for half in range(2):
                wo = 2 * pw + half
                col = half * 128 + co * 14 + pw
                b1row[0, col] = b1[co]
                for ci in range(3):
                    for i in range(5):
                        for j in range(5):
                            wbig1[i * 96 + (wo + j) * 3 + ci, col] = w1[co, ci, i, j]

    # conv2 per-vertical-tap banded weights (5, 128, 256): input rows are the
    # pooled-conv1 layout k = ci*14 + pw (84 used, rest zero), output cols are
    # half2*128 + co*5 + qw with w2o = 2*qw + half2.
    wband2 = np.zeros((5, 128, 256), np.float32)
    b2row = np.zeros((1, 256), np.float32)
    for co in range(16):
        for qw in range(5):
            for half2 in range(2):
                w2o = 2 * qw + half2
                col = half2 * 128 + co * 5 + qw
                b2row[0, col] = b2[co]
                for ci in range(6):
                    for i in range(5):
                        for j in range(5):
                            wband2[i, ci * 14 + w2o + j, col] = w2[co, ci, i, j]

    # fc1 per pooled-row-qh weights (5, 128, 128): input col = co*5 + qw (80
    # used), output padded 120 -> 128; the NCHW flatten (co*25 + qh*5 + qw) is
    # baked in here.  fc2/fc3 transposed + zero-padded to 128x128.
    wf1 = np.zeros((5, 128, 128), np.float32)
    for qh in range(5):
        for co in range(16):
            for qw in range(5):
                wf1[qh, co * 5 + qw, :120] = fw1[:, co * 25 + qh * 5 + qw]
    bf1 = np.zeros((1, 128), np.float32); bf1[0, :120] = fb1

    wf2p = np.zeros((128, 128), np.float32); wf2p[:120, :84] = fw2.T
    bf2 = np.zeros((1, 128), np.float32); bf2[0, :84] = fb2
    wf3p = np.zeros((128, 128), np.float32); wf3p[:84, :10] = fw3.T
    bf3 = np.zeros((1, 128), np.float32); bf3[0, :10] = fb3

    as_bf16 = lambda a: jnp.asarray(a, dtype=jnp.bfloat16)
    as_f32 = lambda a: jnp.asarray(a, dtype=jnp.float32)
    return {
        "w1": as_bf16(wbig1), "b1": as_f32(b1row),
        "w2": as_bf16(wband2), "b2": as_f32(b2row),
        "wf1": as_bf16(wf1), "bf1": as_f32(bf1),
        "wf2": as_bf16(wf2p), "bf2": as_f32(bf2),
        "wf3": as_bf16(wf3p), "bf3": as_f32(bf3),
    }


# ----------------------------------------------------------------------------
# Pure-JAX reference (mirrors the PyTorch module) for a sanity check
# ----------------------------------------------------------------------------
def net_forward_reference(x_nchw, raw):
    x = x_nchw.astype(jnp.float32)

    def conv(h, w, b):
        out = jax.lax.conv_general_dilated(
            h, w, (1, 1), "VALID", dimension_numbers=("NCHW", "OIHW", "NCHW"))
        return out + b[None, :, None, None]

    def pool(h):
        B, C, H, W = h.shape
        return h.reshape(B, C, H // 2, 2, W // 2, 2).max(axis=(3, 5))

    h = pool(jax.nn.relu(conv(x, raw["conv1_w"], raw["conv1_b"])))
    h = pool(jax.nn.relu(conv(h, raw["conv2_w"], raw["conv2_b"])))
    h = h.reshape(h.shape[0], 16 * 5 * 5)
    h = jax.nn.relu(h @ raw["fc1_w"].T + raw["fc1_b"])
    h = jax.nn.relu(h @ raw["fc2_w"].T + raw["fc2_b"])
    return h @ raw["fc3_w"].T + raw["fc3_b"]


# ----------------------------------------------------------------------------
if __name__ == "__main__":
    key = jax.random.PRNGKey(0)
    k_x, k_p = jax.random.split(key)

    # batch=2; 3x32x32 input is forced by the 16*5*5 flatten in the module.
    x = jax.random.normal(k_x, (2, 3, 32, 32), dtype=jnp.float32)
    raw = init_params(k_p)
    prep = prepare_params(raw)

    out = jax.block_until_ready(net_forward(x, prep))
    assert out.shape == (2, 10), out.shape

    ref = jax.block_until_ready(net_forward_reference(x, raw))
    max_err = float(jnp.max(jnp.abs(out - ref)))
    assert jnp.allclose(out, ref, atol=3e-2, rtol=3e-2), max_err

    print("KERNEL_OK")
</pallas_src>

<mosaic_0001>
module attributes {stable_mosaic.version = 11 : i64} {
  func.func @_net_kernel(%arg0: i32, %arg1: memref<4x14x480xbf16, #tpu.memory_space<vmem>>, %arg2: memref<480x256xbf16, #tpu.memory_space<vmem>>, %arg3: memref<1x256xf32, #tpu.memory_space<vmem>>, %arg4: memref<5x128x256xbf16, #tpu.memory_space<vmem>>, %arg5: memref<1x256xf32, #tpu.memory_space<vmem>>, %arg6: memref<5x128x128xbf16, #tpu.memory_space<vmem>>, %arg7: memref<1x128xf32, #tpu.memory_space<vmem>>, %arg8: memref<128x128xbf16, #tpu.memory_space<vmem>>, %arg9: memref<1x128xf32, #tpu.memory_space<vmem>>, %arg10: memref<128x128xbf16, #tpu.memory_space<vmem>>, %arg11: memref<1x128xf32, #tpu.memory_space<vmem>>, %arg12: memref<2x128xf32, #tpu.memory_space<vmem>>, %arg13: memref<14x128xf32, #tpu.memory_space<vmem>>, %arg14: memref<14x128xf32, #tpu.memory_space<vmem>>) attributes {dimension_semantics = [#tpu.dimension_semantics<parallel>], iteration_bounds = array<i64: 1>, scalar_prefetch = 0 : i64, scratch_operands = 2 : i64, tpu.core_type = #tpu.core_type<tc>, window_params = [{transform_indices = @transform_0, window_bounds = array<i64: 4, 14, 480>}, {pipeline_mode = #tpu.pipeline_mode<synchronous>, transform_indices = @transform_1, window_bounds = array<i64: 480, 256>}, {pipeline_mode = #tpu.pipeline_mode<synchronous>, transform_indices = @transform_2, window_bounds = array<i64: 1, 256>}, {pipeline_mode = #tpu.pipeline_mode<synchronous>, transform_indices = @transform_3, window_bounds = array<i64: 5, 128, 256>}, {pipeline_mode = #tpu.pipeline_mode<synchronous>, transform_indices = @transform_4, window_bounds = array<i64: 1, 256>}, {pipeline_mode = #tpu.pipeline_mode<synchronous>, transform_indices = @transform_5, window_bounds = array<i64: 5, 128, 128>}, {pipeline_mode = #tpu.pipeline_mode<synchronous>, transform_indices = @transform_6, window_bounds = array<i64: 1, 128>}, {pipeline_mode = #tpu.pipeline_mode<synchronous>, transform_indices = @transform_7, window_bounds = array<i64: 128, 128>}, {pipeline_mode = #tpu.pipeline_mode<synchronous>, transform_indices = @transform_8, window_bounds = array<i64: 1, 128>}, {pipeline_mode = #tpu.pipeline_mode<synchronous>, transform_indices = @transform_9, window_bounds = array<i64: 128, 128>}, {pipeline_mode = #tpu.pipeline_mode<synchronous>, transform_indices = @transform_10, window_bounds = array<i64: 1, 128>}, {transform_indices = @transform_11, window_bounds = array<i64: 2, 128>}]} {
    %c0 = arith.constant 0 : index
    %c0_0 = arith.constant 0 : index
    %0 = vector.load %arg2[%c0, %c0_0] : memref<480x256xbf16, #tpu.memory_space<vmem>>, vector<480x256xbf16>
    %c0_1 = arith.constant 0 : index
    %c0_2 = arith.constant 0 : index
    %1 = vector.load %arg3[%c0_1, %c0_2] : memref<1x256xf32, #tpu.memory_space<vmem>>, vector<1x256xf32>
    %c0_3 = arith.constant 0 : index
    %c0_4 = arith.constant 0 : index
    %c0_5 = arith.constant 0 : index
    %2 = vector.load %arg1[%c0_3, %c0_4, %c0_5] : memref<4x14x480xbf16, #tpu.memory_space<vmem>>, vector<1x14x480xbf16>
    %3 = vector.shape_cast %2 : vector<1x14x480xbf16> to vector<14x480xbf16>
    %cst = arith.constant dense<0.000000e+00> : vector<14x256xf32>
    %4 = tpu.matmul %3, %0, %cst {dimension_numbers = #tpu.dot_dimension_numbers<[1], [0], [0], [1], [0, 0, 1, 1], [], []>} : vector<14x480xbf16>, vector<480x256xbf16>, vector<14x256xf32> -> vector<14x256xf32>
    %5 = vector.broadcast %1 : vector<1x256xf32> to vector<14x256xf32>
    %6 = arith.addf %4, %5 : vector<14x256xf32>
    %cst_6 = arith.constant 0.000000e+00 : f32
    %7 = vector.broadcast %cst_6 : f32 to vector<14x256xf32>
    %8 = arith.maximumf %6, %7 : vector<14x256xf32>
    %c1 = arith.constant 1 : index
    %c0_7 = arith.constant 0 : index
    %c0_8 = arith.constant 0 : index
    %9 = vector.load %arg1[%c1, %c0_7, %c0_8] : memref<4x14x480xbf16, #tpu.memory_space<vmem>>, vector<1x14x480xbf16>
    %10 = vector.shape_cast %9 : vector<1x14x480xbf16> to vector<14x480xbf16>
    %cst_9 = arith.constant dense<0.000000e+00> : vector<14x256xf32>
    %11 = tpu.matmul %10, %0, %cst_9 {dimension_numbers = #tpu.dot_dimension_numbers<[1], [0], [0], [1], [0, 0, 1, 1], [], []>} : vector<14x480xbf16>, vector<480x256xbf16>, vector<14x256xf32> -> vector<14x256xf32>
    %12 = vector.broadcast %1 : vector<1x256xf32> to vector<14x256xf32>
    %13 = arith.addf %11, %12 : vector<14x256xf32>
    %cst_10 = arith.constant 0.000000e+00 : f32
    %14 = vector.broadcast %cst_10 : f32 to vector<14x256xf32>
    %15 = arith.maximumf %13, %14 : vector<14x256xf32>
    %16 = arith.maximumf %8, %15 : vector<14x256xf32>
    %17 = vector.extract_strided_slice %16 {offsets = [0, 0], sizes = [14, 128], strides = [1, 1]} : vector<14x256xf32> to vector<14x128xf32>
    %18 = vector.extract_strided_slice %16 {offsets = [0, 128], sizes = [14, 128], strides = [1, 1]} : vector<14x256xf32> to vector<14x128xf32>
    %19 = arith.maximumf %17, %18 : vector<14x128xf32>
    %c0_11 = arith.constant 0 : index
    %c0_12 = arith.constant 0 : index
    %20 = vector.load %arg13[%c0_11, %c0_12] : memref<14x128xf32, #tpu.memory_space<vmem>>, vector<14x128xf32>
    tpu.vector_store %arg13[%c0_11, %c0_12], %19 {strides = array<i32>} : memref<14x128xf32, #tpu.memory_space<vmem>>, vector<14x128xf32>,
    %c2 = arith.constant 2 : index
    %c0_13 = arith.constant 0 : index
    %c0_14 = arith.constant 0 : index
    %21 = vector.load %arg1[%c2, %c0_13, %c0_14] : memref<4x14x480xbf16, #tpu.memory_space<vmem>>, vector<1x14x480xbf16>
    %22 = vector.shape_cast %21 : vector<1x14x480xbf16> to vector<14x480xbf16>
    %cst_15 = arith.constant dense<0.000000e+00> : vector<14x256xf32>
    %23 = tpu.matmul %22, %0, %cst_15 {dimension_numbers = #tpu.dot_dimension_numbers<[1], [0], [0], [1], [0, 0, 1, 1], [], []>} : vector<14x480xbf16>, vector<480x256xbf16>, vector<14x256xf32> -> vector<14x256xf32>
    %24 = vector.broadcast %1 : vector<1x256xf32> to vector<14x256xf32>
    %25 = arith.addf %23, %24 : vector<14x256xf32>
    %cst_16 = arith.constant 0.000000e+00 : f32
    %26 = vector.broadcast %cst_16 : f32 to vector<14x256xf32>
    %27 = arith.maximumf %25, %26 : vector<14x256xf32>
    %c3 = arith.constant 3 : index
    %c0_17 = arith.constant 0 : index
    %c0_18 = arith.constant 0 : index
    %28 = vector.load %arg1[%c3, %c0_17, %c0_18] : memref<4x14x480xbf16, #tpu.memory_space<vmem>>, vector<1x14x480xbf16>
    %29 = vector.shape_cast %28 : vector<1x14x480xbf16> to vector<14x480xbf16>
    %cst_19 = arith.constant dense<0.000000e+00> : vector<14x256xf32>
    %30 = tpu.matmul %29, %0, %cst_19 {dimension_numbers = #tpu.dot_dimension_numbers<[1], [0], [0], [1], [0, 0, 1, 1], [], []>} : vector<14x480xbf16>, vector<480x256xbf16>, vector<14x256xf32> -> vector<14x256xf32>
    %31 = vector.broadcast %1 : vector<1x256xf32> to vector<14x256xf32>
    %32 = arith.addf %30, %31 : vector<14x256xf32>
    %cst_20 = arith.constant 0.000000e+00 : f32
    %33 = vector.broadcast %cst_20 : f32 to vector<14x256xf32>
    %34 = arith.maximumf %32, %33 : vector<14x256xf32>
    %35 = arith.maximumf %27, %34 : vector<14x256xf32>
    %36 = vector.extract_strided_slice %35 {offsets = [0, 0], sizes = [14, 128], strides = [1, 1]} : vector<14x256xf32> to vector<14x128xf32>
    %37 = vector.extract_strided_slice %35 {offsets = [0, 128], sizes = [14, 128], strides = [1, 1]} : vector<14x256xf32> to vector<14x128xf32>
    %38 = arith.maximumf %36, %37 : vector<14x128xf32>
    %c0_21 = arith.constant 0 : index
    %c0_22 = arith.constant 0 : index
    %39 = vector.load %arg14[%c0_21, %c0_22] : memref<14x128xf32, #tpu.memory_space<vmem>>, vector<14x128xf32>
    tpu.vector_store %arg14[%c0_21, %c0_22], %38 {strides = array<i32>} : memref<14x128xf32, #tpu.memory_space<vmem>>, vector<14x128xf32>,
    %c0_23 = arith.constant 0 : index
    %c0_24 = arith.constant 0 : index
    %40 = vector.load %arg5[%c0_23, %c0_24] : memref<1x256xf32, #tpu.memory_space<vmem>>, vector<1x256xf32>
    %c0_25 = arith.constant 0 : index
    %c0_26 = arith.constant 0 : index
    %41 = vector.load %arg13[%c0_25, %c0_26] : memref<14x128xf32, #tpu.memory_space<vmem>>, vector<10x128xf32>
    %42 = arith.truncf %41 : vector<10x128xf32> to vector<10x128xbf16>
    %c0_27 = arith.constant 0 : index
    %c0_28 = arith.constant 0 : index
    %c0_29 = arith.constant 0 : index
    %43 = vector.load %arg4[%c0_27, %c0_28, %c0_29] : memref<5x128x256xbf16, #tpu.memory_space<vmem>>, vector<1x128x256xbf16>
    %44 = vector.shape_cast %43 : vector<1x128x256xbf16> to vector<128x256xbf16>
    %cst_30 = arith.constant dense<0.000000e+00> : vector<10x256xf32>
    %45 = tpu.matmul %42, %44, %cst_30 {dimension_numbers = #tpu.dot_dimension_numbers<[1], [0], [0], [1], [0, 0, 1, 1], [], []>} : vector<10x128xbf16>, vector<128x256xbf16>, vector<10x256xf32> -> vector<10x256xf32>
    %c0_31 = arith.constant 0 : index
    %c0_32 = arith.constant 0 : index
    %46 = vector.load %arg14[%c0_31, %c0_32] : memref<14x128xf32, #tpu.memory_space<vmem>>, vector<10x128xf32>
    %47 = arith.truncf %46 : vector<10x128xf32> to vector<10x128xbf16>
    %c1_33 = arith.constant 1 : index
    %c0_34 = arith.constant 0 : index
    %c0_35 = arith.constant 0 : index
    %48 = vector.load %arg4[%c1_33, %c0_34, %c0_35] : memref<5x128x256xbf16, #tpu.memory_space<vmem>>, vector<1x128x256xbf16>
    %49 = vector.shape_cast %48 : vector<1x128x256xbf16> to vector<128x256xbf16>
    %cst_36 = arith.constant dense<0.000000e+00> : vector<10x256xf32>
    %50 = tpu.matmul %47, %49, %cst_36 {dimension_numbers = #tpu.dot_dimension_numbers<[1], [0], [0], [1], [0, 0, 1, 1], [], []>} : vector<10x128xbf16>, vector<128x256xbf16>, vector<10x256xf32> -> vector<10x256xf32>
    %51 = arith.addf %45, %50 : vector<10x256xf32>
    %c2_37 = arith.constant 2 : index
    %c0_38 = arith.constant 0 : index
    %52 = vector.load %arg13[%c2_37, %c0_38] : memref<14x128xf32, #tpu.memory_space<vmem>>, vector<10x128xf32>
    %53 = arith.truncf %52 : vector<10x128xf32> to vector<10x128xbf16>
    %c2_39 = arith.constant 2 : index
    %c0_40 = arith.constant 0 : index
    %c0_41 = arith.constant 0 : index
    %54 = vector.load %arg4[%c2_39, %c0_40, %c0_41] : memref<5x128x256xbf16, #tpu.memory_space<vmem>>, vector<1x128x256xbf16>
    %55 = vector.shape_cast %54 : vector<1x128x256xbf16> to vector<128x256xbf16>
    %cst_42 = arith.constant dense<0.000000e+00> : vector<10x256xf32>
    %56 = tpu.matmul %53, %55, %cst_42 {dimension_numbers = #tpu.dot_dimension_numbers<[1], [0], [0], [1], [0, 0, 1, 1], [], []>} : vector<10x128xbf16>, vector<128x256xbf16>, vector<10x256xf32> -> vector<10x256xf32>
    %57 = arith.addf %51, %56 : vector<10x256xf32>
    %c2_43 = arith.constant 2 : index
    %c0_44 = arith.constant 0 : index
    %58 = vector.load %arg14[%c2_43, %c0_44] : memref<14x128xf32, #tpu.memory_space<vmem>>, vector<10x128xf32>
    %59 = arith.truncf %58 : vector<10x128xf32> to vector<10x128xbf16>
    %c3_45 = arith.constant 3 : index
    %c0_46 = arith.constant 0 : index
    %c0_47 = arith.constant 0 : index
    %60 = vector.load %arg4[%c3_45, %c0_46, %c0_47] : memref<5x128x256xbf16, #tpu.memory_space<vmem>>, vector<1x128x256xbf16>
    %61 = vector.shape_cast %60 : vector<1x128x256xbf16> to vector<128x256xbf16>
    %cst_48 = arith.constant dense<0.000000e+00> : vector<10x256xf32>
    %62 = tpu.matmul %59, %61, %cst_48 {dimension_numbers = #tpu.dot_dimension_numbers<[1], [0], [0], [1], [0, 0, 1, 1], [], []>} : vector<10x128xbf16>, vector<128x256xbf16>, vector<10x256xf32> -> vector<10x256xf32>
    %63 = arith.addf %57, %62 : vector<10x256xf32>
    %c4 = arith.constant 4 : index
    %c0_49 = arith.constant 0 : index
    %64 = vector.load %arg13[%c4, %c0_49] : memref<14x128xf32, #tpu.memory_space<vmem>>, vector<10x128xf32>
    %65 = arith.truncf %64 : vector<10x128xf32> to vector<10x128xbf16>
    %c4_50 = arith.constant 4 : index
    %c0_51 = arith.constant 0 : index
    %c0_52 = arith.constant 0 : index
    %66 = vector.load %arg4[%c4_50, %c0_51, %c0_52] : memref<5x128x256xbf16, #tpu.memory_space<vmem>>, vector<1x128x256xbf16>
    %67 = vector.shape_cast %66 : vector<1x128x256xbf16> to vector<128x256xbf16>
    %cst_53 = arith.constant dense<0.000000e+00> : vector<10x256xf32>
    %68 = tpu.matmul %65, %67, %cst_53 {dimension_numbers = #tpu.dot_dimension_numbers<[1], [0], [0], [1], [0, 0, 1, 1], [], []>} : vector<10x128xbf16>, vector<128x256xbf16>, vector<10x256xf32> -> vector<10x256xf32>
    %69 = arith.addf %63, %68 : vector<10x256xf32>
    %70 = vector.broadcast %40 : vector<1x256xf32> to vector<10x256xf32>
    %71 = arith.addf %69, %70 : vector<10x256xf32>
    %cst_54 = arith.constant 0.000000e+00 : f32
    %72 = vector.broadcast %cst_54 : f32 to vector<10x256xf32>
    %73 = arith.maximumf %71, %72 : vector<10x256xf32>
    %c0_55 = arith.constant 0 : index
    %c0_56 = arith.constant 0 : index
    %74 = vector.load %arg14[%c0_55, %c0_56] : memref<14x128xf32, #tpu.memory_space<vmem>>, vector<10x128xf32>
    %75 = arith.truncf %74 : vector<10x128xf32> to vector<10x128xbf16>
    %c0_57 = arith.constant 0 : index
    %c0_58 = arith.constant 0 : index
    %c0_59 = arith.constant 0 : index
    %76 = vector.load %arg4[%c0_57, %c0_58, %c0_59] : memref<5x128x256xbf16, #tpu.memory_space<vmem>>, vector<1x128x256xbf16>
    %77 = vector.shape_cast %76 : vector<1x128x256xbf16> to vector<128x256xbf16>
    %cst_60 = arith.constant dense<0.000000e+00> : vector<10x256xf32>
    %78 = tpu.matmul %75, %77, %cst_60 {dimension_numbers = #tpu.dot_dimension_numbers<[1], [0], [0], [1], [0, 0, 1, 1], [], []>} : vector<10x128xbf16>, vector<128x256xbf16>, vector<10x256xf32> -> vector<10x256xf32>
    %c2_61 = arith.constant 2 : index
    %c0_62 = arith.constant 0 : index
    %79 = vector.load %arg13[%c2_61, %c0_62] : memref<14x128xf32, #tpu.memory_space<vmem>>, vector<10x128xf32>
    %80 = arith.truncf %79 : vector<10x128xf32> to vector<10x128xbf16>
    %c1_63 = arith.constant 1 : index
    %c0_64 = arith.constant 0 : index
    %c0_65 = arith.constant 0 : index
    %81 = vector.load %arg4[%c1_63, %c0_64, %c0_65] : memref<5x128x256xbf16, #tpu.memory_space<vmem>>, vector<1x128x256xbf16>
    %82 = vector.shape_cast %81 : vector<1x128x256xbf16> to vector<128x256xbf16>
    %cst_66 = arith.constant dense<0.000000e+00> : vector<10x256xf32>
    %83 = tpu.matmul %80, %82, %cst_66 {dimension_numbers = #tpu.dot_dimension_numbers<[1], [0], [0], [1], [0, 0, 1, 1], [], []>} : vector<10x128xbf16>, vector<128x256xbf16>, vector<10x256xf32> -> vector<10x256xf32>
    %84 = arith.addf %78, %83 : vector<10x256xf32>
    %c2_67 = arith.constant 2 : index
    %c0_68 = arith.constant 0 : index
    %85 = vector.load %arg14[%c2_67, %c0_68] : memref<14x128xf32, #tpu.memory_space<vmem>>, vector<10x128xf32>
    %86 = arith.truncf %85 : vector<10x128xf32> to vector<10x128xbf16>
    %c2_69 = arith.constant 2 : index
    %c0_70 = arith.constant 0 : index
    %c0_71 = arith.constant 0 : index
    %87 = vector.load %arg4[%c2_69, %c0_70, %c0_71] : memref<5x128x256xbf16, #tpu.memory_space<vmem>>, vector<1x128x256xbf16>
    %88 = vector.shape_cast %87 : vector<1x128x256xbf16> to vector<128x256xbf16>
    %cst_72 = arith.constant dense<0.000000e+00> : vector<10x256xf32>
    %89 = tpu.matmul %86, %88, %cst_72 {dimension_numbers = #tpu.dot_dimension_numbers<[1], [0], [0], [1], [0, 0, 1, 1], [], []>} : vector<10x128xbf16>, vector<128x256xbf16>, vector<10x256xf32> -> vector<10x256xf32>
    %90 = arith.addf %84, %89 : vector<10x256xf32>
    %c4_73 = arith.constant 4 : index
    %c0_74 = arith.constant 0 : index
    %91 = vector.load %arg13[%c4_73, %c0_74] : memref<14x128xf32, #tpu.memory_space<vmem>>, vector<10x128xf32>
    %92 = arith.truncf %91 : vector<10x128xf32> to vector<10x128xbf16>
    %c3_75 = arith.constant 3 : index
    %c0_76 = arith.constant 0 : index
    %c0_77 = arith.constant 0 : index
    %93 = vector.load %arg4[%c3_75, %c0_76, %c0_77] : memref<5x128x256xbf16, #tpu.memory_space<vmem>>, vector<1x128x256xbf16>
    %94 = vector.shape_cast %93 : vector<1x128x256xbf16> to vector<128x256xbf16>
    %cst_78 = arith.constant dense<0.000000e+00> : vector<10x256xf32>
    %95 = tpu.matmul %92, %94, %cst_78 {dimension_numbers = #tpu.dot_dimension_numbers<[1], [0], [0], [1], [0, 0, 1, 1], [], []>} : vector<10x128xbf16>, vector<128x256xbf16>, vector<10x256xf32> -> vector<10x256xf32>
    %96 = arith.addf %90, %95 : vector<10x256xf32>
    %c4_79 = arith.constant 4 : index
    %c0_80 = arith.constant 0 : index
    %97 = vector.load %arg14[%c4_79, %c0_80] : memref<14x128xf32, #tpu.memory_space<vmem>>, vector<10x128xf32>
    %98 = arith.truncf %97 : vector<10x128xf32> to vector<10x128xbf16>
    %c4_81 = arith.constant 4 : index
    %c0_82 = arith.constant 0 : index
    %c0_83 = arith.constant 0 : index
    %99 = vector.load %arg4[%c4_81, %c0_82, %c0_83] : memref<5x128x256xbf16, #tpu.memory_space<vmem>>, vector<1x128x256xbf16>
    %100 = vector.shape_cast %99 : vector<1x128x256xbf16> to vector<128x256xbf16>
    %cst_84 = arith.constant dense<0.000000e+00> : vector<10x256xf32>
    %101 = tpu.matmul %98, %100, %cst_84 {dimension_numbers = #tpu.dot_dimension_numbers<[1], [0], [0], [1], [0, 0, 1, 1], [], []>} : vector<10x128xbf16>, vector<128x256xbf16>, vector<10x256xf32> -> vector<10x256xf32>
    %102 = arith.addf %96, %101 : vector<10x256xf32>
    %103 = vector.broadcast %40 : vector<1x256xf32> to vector<10x256xf32>
    %104 = arith.addf %102, %103 : vector<10x256xf32>
    %cst_85 = arith.constant 0.000000e+00 : f32
    %105 = vector.broadcast %cst_85 : f32 to vector<10x256xf32>
    %106 = arith.maximumf %104, %105 : vector<10x256xf32>
    %107 = arith.maximumf %73, %106 : vector<10x256xf32>
    %108 = vector.extract_strided_slice %107 {offsets = [0, 0], sizes = [10, 128], strides = [1, 1]} : vector<10x256xf32> to vector<10x128xf32>
    %109 = vector.extract_strided_slice %107 {offsets = [0, 128], sizes = [10, 128], strides = [1, 1]} : vector<10x256xf32> to vector<10x128xf32>
    %110 = arith.maximumf %108, %109 : vector<10x128xf32>
    %c0_86 = arith.constant 0 : index
    %c0_87 = arith.constant 0 : index
    %111 = vector.load %arg7[%c0_86, %c0_87] : memref<1x128xf32, #tpu.memory_space<vmem>>, vector<1x128xf32>
    %112 = vector.extract_strided_slice %110 {offsets = [0, 0], sizes = [2, 128], strides = [1, 1]} : vector<10x128xf32> to vector<2x128xf32>
    %113 = arith.truncf %112 : vector<2x128xf32> to vector<2x128xbf16>
    %c0_88 = arith.constant 0 : index
    %c0_89 = arith.constant 0 : index
    %c0_90 = arith.constant 0 : index
    %114 = vector.load %arg6[%c0_88, %c0_89, %c0_90] : memref<5x128x128xbf16, #tpu.memory_space<vmem>>, vector<1x128x128xbf16>
    %115 = vector.shape_cast %114 : vector<1x128x128xbf16> to vector<128x128xbf16>
    %cst_91 = arith.constant dense<0.000000e+00> : vector<2x128xf32>
    %116 = tpu.matmul %113, %115, %cst_91 {dimension_numbers = #tpu.dot_dimension_numbers<[1], [0], [0], [1], [0, 0, 1, 1], [], []>} : vector<2x128xbf16>, vector<128x128xbf16>, vector<2x128xf32> -> vector<2x128xf32>
    %117 = vector.broadcast %111 : vector<1x128xf32> to vector<2x128xf32>
    %118 = arith.addf %117, %116 : vector<2x128xf32>
    %119 = vector.extract_strided_slice %110 {offsets = [2, 0], sizes = [2, 128], strides = [1, 1]} : vector<10x128xf32> to vector<2x128xf32>
    %120 = arith.truncf %119 : vector<2x128xf32> to vector<2x128xbf16>
    %c1_92 = arith.constant 1 : index
    %c0_93 = arith.constant 0 : index
    %c0_94 = arith.constant 0 : index
    %121 = vector.load %arg6[%c1_92, %c0_93, %c0_94] : memref<5x128x128xbf16, #tpu.memory_space<vmem>>, vector<1x128x128xbf16>
    %122 = vector.shape_cast %121 : vector<1x128x128xbf16> to vector<128x128xbf16>
    %cst_95 = arith.constant dense<0.000000e+00> : vector<2x128xf32>
    %123 = tpu.matmul %120, %122, %cst_95 {dimension_numbers = #tpu.dot_dimension_numbers<[1], [0], [0], [1], [0, 0, 1, 1], [], []>} : vector<2x128xbf16>, vector<128x128xbf16>, vector<2x128xf32> -> vector<2x128xf32>
    %124 = arith.addf %118, %123 : vector<2x128xf32>
    %125 = vector.extract_strided_slice %110 {offsets = [4, 0], sizes = [2, 128], strides = [1, 1]} : vector<10x128xf32> to vector<2x128xf32>
    %126 = arith.truncf %125 : vector<2x128xf32> to vector<2x128xbf16>
    %c2_96 = arith.constant 2 : index
    %c0_97 = arith.constant 0 : index
    %c0_98 = arith.constant 0 : index
    %127 = vector.load %arg6[%c2_96, %c0_97, %c0_98] : memref<5x128x128xbf16, #tpu.memory_space<vmem>>, vector<1x128x128xbf16>
    %128 = vector.shape_cast %127 : vector<1x128x128xbf16> to vector<128x128xbf16>
    %cst_99 = arith.constant dense<0.000000e+00> : vector<2x128xf32>
    %129 = tpu.matmul %126, %128, %cst_99 {dimension_numbers = #tpu.dot_dimension_numbers<[1], [0], [0], [1], [0, 0, 1, 1], [], []>} : vector<2x128xbf16>, vector<128x128xbf16>, vector<2x128xf32> -> vector<2x128xf32>
    %130 = arith.addf %124, %129 : vector<2x128xf32>
    %131 = vector.extract_strided_slice %110 {offsets = [6, 0], sizes = [2, 128], strides = [1, 1]} : vector<10x128xf32> to vector<2x128xf32>
    %132 = arith.truncf %131 : vector<2x128xf32> to vector<2x128xbf16>
    %c3_100 = arith.constant 3 : index
    %c0_101 = arith.constant 0 : index
    %c0_102 = arith.constant 0 : index
    %133 = vector.load %arg6[%c3_100, %c0_101, %c0_102] : memref<5x128x128xbf16, #tpu.memory_space<vmem>>, vector<1x128x128xbf16>
    %134 = vector.shape_cast %133 : vector<1x128x128xbf16> to vector<128x128xbf16>
    %cst_103 = arith.constant dense<0.000000e+00> : vector<2x128xf32>
    %135 = tpu.matmul %132, %134, %cst_103 {dimension_numbers = #tpu.dot_dimension_numbers<[1], [0], [0], [1], [0, 0, 1, 1], [], []>} : vector<2x128xbf16>, vector<128x128xbf16>, vector<2x128xf32> -> vector<2x128xf32>
    %136 = arith.addf %130, %135 : vector<2x128xf32>
    %137 = vector.extract_strided_slice %110 {offsets = [8, 0], sizes = [2, 128], strides = [1, 1]} : vector<10x128xf32> to vector<2x128xf32>
    %138 = arith.truncf %137 : vector<2x128xf32> to vector<2x128xbf16>
    %c4_104 = arith.constant 4 : index
    %c0_105 = arith.constant 0 : index
    %c0_106 = arith.constant 0 : index
    %139 = vector.load %arg6[%c4_104, %c0_105, %c0_106] : memref<5x128x128xbf16, #tpu.memory_space<vmem>>, vector<1x128x128xbf16>
    %140 = vector.shape_cast %139 : vector<1x128x128xbf16> to vector<128x128xbf16>
    %cst_107 = arith.constant dense<0.000000e+00> : vector<2x128xf32>
    %141 = tpu.matmul %138, %140, %cst_107 {dimension_numbers = #tpu.dot_dimension_numbers<[1], [0], [0], [1], [0, 0, 1, 1], [], []>} : vector<2x128xbf16>, vector<128x128xbf16>, vector<2x128xf32> -> vector<2x128xf32>
    %142 = arith.addf %136, %141 : vector<2x128xf32>
    %cst_108 = arith.constant 0.000000e+00 : f32
    %143 = vector.broadcast %cst_108 : f32 to vector<2x128xf32>
    %144 = arith.maximumf %142, %143 : vector<2x128xf32>
    %145 = arith.truncf %144 : vector<2x128xf32> to vector<2x128xbf16>
    %c0_109 = arith.constant 0 : index
    %c0_110 = arith.constant 0 : index
    %146 = vector.load %arg8[%c0_109, %c0_110] : memref<128x128xbf16, #tpu.memory_space<vmem>>, vector<128x128xbf16>
    %cst_111 = arith.constant dense<0.000000e+00> : vector<2x128xf32>
    %147 = tpu.matmul %145, %146, %cst_111 {dimension_numbers = #tpu.dot_dimension_numbers<[1], [0], [0], [1], [0, 0, 1, 1], [], []>} : vector<2x128xbf16>, vector<128x128xbf16>, vector<2x128xf32> -> vector<2x128xf32>
    %c0_112 = arith.constant 0 : index
    %c0_113 = arith.constant 0 : index
    %148 = vector.load %arg9[%c0_112, %c0_113] : memref<1x128xf32, #tpu.memory_space<vmem>>, vector<1x128xf32>
    %149 = vector.broadcast %148 : vector<1x128xf32> to vector<2x128xf32>
    %150 = arith.addf %147, %149 : vector<2x128xf32>
    %cst_114 = arith.constant 0.000000e+00 : f32
    %151 = vector.broadcast %cst_114 : f32 to vector<2x128xf32>
    %152 = arith.maximumf %150, %151 : vector<2x128xf32>
    %153 = arith.truncf %152 : vector<2x128xf32> to vector<2x128xbf16>
    %c0_115 = arith.constant 0 : index
    %c0_116 = arith.constant 0 : index
    %154 = vector.load %arg10[%c0_115, %c0_116] : memref<128x128xbf16, #tpu.memory_space<vmem>>, vector<128x128xbf16>
    %cst_117 = arith.constant dense<0.000000e+00> : vector<2x128xf32>
    %155 = tpu.matmul %153, %154, %cst_117 {dimension_numbers = #tpu.dot_dimension_numbers<[1], [0], [0], [1], [0, 0, 1, 1], [], []>} : vector<2x128xbf16>, vector<128x128xbf16>, vector<2x128xf32> -> vector<2x128xf32>
    %c0_118 = arith.constant 0 : index
    %c0_119 = arith.constant 0 : index
    %156 = vector.load %arg11[%c0_118, %c0_119] : memref<1x128xf32, #tpu.memory_space<vmem>>, vector<1x128xf32>
    %157 = vector.broadcast %156 : vector<1x128xf32> to vector<2x128xf32>
    %158 = arith.addf %155, %157 : vector<2x128xf32>
    %c0_120 = arith.constant 0 : index
    %c0_121 = arith.constant 0 : index
    %159 = vector.load %arg12[%c0_120, %c0_121] : memref<2x128xf32, #tpu.memory_space<vmem>>, vector<2x128xf32>
    tpu.vector_store %arg12[%c0_120, %c0_121], %158 {strides = array<i32>} : memref<2x128xf32, #tpu.memory_space<vmem>>, vector<2x128xf32>,
    return
  }
  func.func @transform_0(%arg0: i32) -> (i32, i32, i32) {
    %c0_i32 = arith.constant 0 : i32
    %c0_i32_0 = arith.constant 0 : i32
    %c0_i32_1 = arith.constant 0 : i32
    return %c0_i32, %arg0, %c0_i32_0 : i32, i32, i32
  }
  func.func @transform_1(%arg0: i32) -> (i32, i32) {
    %c0_i32 = arith.constant 0 : i32
    %c0_i32_0 = arith.constant 0 : i32
    %c0_i32_1 = arith.constant 0 : i32
    return %c0_i32, %c0_i32_0 : i32, i32
  }
  func.func @transform_2(%arg0: i32) -> (i32, i32) {
    %c0_i32 = arith.constant 0 : i32
    %c0_i32_0 = arith.constant 0 : i32
    %c0_i32_1 = arith.constant 0 : i32
    return %c0_i32, %c0_i32_0 : i32, i32
  }
  func.func @transform_3(%arg0: i32) -> (i32, i32, i32) {
    %c0_i32 = arith.constant 0 : i32
    %c0_i32_0 = arith.constant 0 : i32
    %c0_i32_1 = arith.constant 0 : i32
    %c0_i32_2 = arith.constant 0 : i32
    return %c0_i32, %c0_i32_0, %c0_i32_1 : i32, i32, i32
  }
  func.func @transform_4(%arg0: i32) -> (i32, i32) {
    %c0_i32 = arith.constant 0 : i32
    %c0_i32_0 = arith.constant 0 : i32
    %c0_i32_1 = arith.constant 0 : i32
    return %c0_i32, %c0_i32_0 : i32, i32
  }
  func.func @transform_5(%arg0: i32) -> (i32, i32, i32) {
    %c0_i32 = arith.constant 0 : i32
    %c0_i32_0 = arith.constant 0 : i32
    %c0_i32_1 = arith.constant 0 : i32
    %c0_i32_2 = arith.constant 0 : i32
    return %c0_i32, %c0_i32_0, %c0_i32_1 : i32, i32, i32
  }
  func.func @transform_6(%arg0: i32) -> (i32, i32) {
    %c0_i32 = arith.constant 0 : i32
    %c0_i32_0 = arith.constant 0 : i32
    %c0_i32_1 = arith.constant 0 : i32
    return %c0_i32, %c0_i32_0 : i32, i32
  }
  func.func @transform_7(%arg0: i32) -> (i32, i32) {
    %c0_i32 = arith.constant 0 : i32
    %c0_i32_0 = arith.constant 0 : i32
    %c0_i32_1 = arith.constant 0 : i32
    return %c0_i32, %c0_i32_0 : i32, i32
  }
  func.func @transform_8(%arg0: i32) -> (i32, i32) {
    %c0_i32 = arith.constant 0 : i32
    %c0_i32_0 = arith.constant 0 : i32
    %c0_i32_1 = arith.constant 0 : i32
    return %c0_i32, %c0_i32_0 : i32, i32
  }
  func.func @transform_9(%arg0: i32) -> (i32, i32) {
    %c0_i32 = arith.constant 0 : i32
    %c0_i32_0 = arith.constant 0 : i32
    %c0_i32_1 = arith.constant 0 : i32
    return %c0_i32, %c0_i32_0 : i32, i32
  }
  func.func @transform_10(%arg0: i32) -> (i32, i32) {
    %c0_i32 = arith.constant 0 : i32
    %c0_i32_0 = arith.constant 0 : i32
    %c0_i32_1 = arith.constant 0 : i32
    return %c0_i32, %c0_i32_0 : i32, i32
  }
  func.func @transform_11(%arg0: i32) -> (i32, i32) {
    %c0_i32 = arith.constant 0 : i32
    %c0_i32_0 = arith.constant 0 : i32
    return %arg0, %c0_i32 : i32, i32
  }
}

</mosaic_0001>

<llo_original>
// kernel: net_forward.1
$region0: #{net_forward.1}
  #allocation0 [shape = 'u32[]', space=smem, size = 0x4, offset = 0x4, fixed_abs, tag = 'smem constant byte address 0x4 - core index']
  #allocation1 [shape = 'u32[144,128]{1,0:T(1,128)}', space=vmem, size = 0x12000, scoped, tag = 'internal scratch']
  #allocation2 [shape = 'f32[14,128]{1,0:T(8,128)}', space=vmem, size = 0x2000, scoped, tag = 'scratch operand']
  #allocation3 [shape = 'f32[14,128]{1,0:T(8,128)}', space=vmem, size = 0x2000, scoped, tag = 'scratch operand']
  %s0 = inlined_call_operand.vmem [shape: bf16[4,14,480], index: 0, kind: input, shape index: {}]
  %s1 = inlined_call_operand.vmem [shape: bf16[480,256], index: 1, kind: input, shape index: {}]
  %s2 = inlined_call_operand.vmem [shape: f32[1,256], index: 2, kind: input, shape index: {}]
  %s3 = inlined_call_operand.vmem [shape: bf16[5,128,256], index: 3, kind: input, shape index: {}]
  %s4 = inlined_call_operand.vmem [shape: f32[1,256], index: 4, kind: input, shape index: {}]
  %s5 = inlined_call_operand.vmem [shape: bf16[5,128,128], index: 5, kind: input, shape index: {}]
  %s6 = inlined_call_operand.vmem [shape: f32[1,128], index: 6, kind: input, shape index: {}]
  %s7 = inlined_call_operand.vmem [shape: bf16[128,128], index: 7, kind: input, shape index: {}]
  %s8 = inlined_call_operand.vmem [shape: f32[1,128], index: 8, kind: input, shape index: {}]
  %s9 = inlined_call_operand.vmem [shape: bf16[128,128], index: 9, kind: input, shape index: {}]
  %s10 = inlined_call_operand.vmem [shape: f32[1,128], index: 10, kind: input, shape index: {}]
  %s11 = inlined_call_operand.hbm [shape: f32[2,128], index: 11, kind: output, shape index: {}]
  %s12 = sld [smem:[#allocation0]]
  $region54: #{net_forward.1} parent=0
    _
  %s14 = ssub.s32 1, %s12
  %s15 = scalar_select 0, %s14, %s12
  $region1: #{net_forward.1} parent=0
    #allocation4 [shape = 'u8[1024]{0}', space=vmem, size = 0x400, scoped, tag = 'output window, operand 0, single buffered']
    #allocation5 [shape = 's32[1]{0}', space=sflag, size = 0x4, scoped, tag = 'scoped memory for net_forward.1']
    %16 = vsyncpa [#allocation5], 0
    // Predicated region
    $region2: #{net_forward.1} parent=1 // pred_check
      _
    $region3: #{net_forward.1} parent=1 // pred_check_branch
      %18 = sbr.rel (0) target = $region5
    $region4: #{net_forward.1} parent=1 // pred_region
      _
    $region5: #{net_forward.1} parent=1 // pred_fallthru
      _
    // Predicated region
    $region6: #{net_forward.1} parent=1 // pred_check
      _
    $region7: #{net_forward.1} parent=1 // pred_check_branch
      %20 = sbr.rel (0) target = $region9
    $region8: #{net_forward.1} parent=1 // pred_region
      _
    $region9: #{net_forward.1} parent=1 // pred_fallthru
      _
    // Predicated region
    $region10: #{net_forward.1} parent=1 // pred_check
      _
    $region11: #{net_forward.1} parent=1 // pred_check_branch
      %22 = sbr.rel (0) target = $region13
    $region12: #{net_forward.1} parent=1 // pred_region
      _
    $region13: #{net_forward.1} parent=1 // pred_fallthru
      _
    // Predicated region
    $region14: #{net_forward.1} parent=1 // pred_check
      _
    $region15: #{net_forward.1} parent=1 // pred_check_branch
      %24 = sbr.rel (0) target = $region17
    $region16: #{net_forward.1} parent=1 // pred_region
      _
    $region17: #{net_forward.1} parent=1 // pred_fallthru
      _
    // Predicated region
    $region18: #{net_forward.1} parent=1 // pred_check
      _
    $region19: #{net_forward.1} parent=1 // pred_check_branch
      %26 = sbr.rel (0) target = $region21
    $region20: #{net_forward.1} parent=1 // pred_region
      _
    $region21: #{net_forward.1} parent=1 // pred_fallthru
      _
    // Predicated region
    $region22: #{net_forward.1} parent=1 // pred_check
      _
    $region23: #{net_forward.1} parent=1 // pred_check_branch
      %28 = sbr.rel (0) target = $region25
    $region24: #{net_forward.1} parent=1 // pred_region
      _
    $region25: #{net_forward.1} parent=1 // pred_fallthru
      _
    // Predicated region
    $region26: #{net_forward.1} parent=1 // pred_check
      _
    $region27: #{net_forward.1} parent=1 // pred_check_branch
      %30 = sbr.rel (0) target = $region29
    $region28: #{net_forward.1} parent=1 // pred_region
      _
    $region29: #{net_forward.1} parent=1 // pred_fallthru
      _
    // Predicated region
    $region30: #{net_forward.1} parent=1 // pred_check
      _
    $region31: #{net_forward.1} parent=1 // pred_check_branch
      %32 = sbr.rel (0) target = $region33
    $region32: #{net_forward.1} parent=1 // pred_region
      _
    $region33: #{net_forward.1} parent=1 // pred_fallthru
      _
    // Predicated region
    $region34: #{net_forward.1} parent=1 // pred_check
      _
    $region35: #{net_forward.1} parent=1 // pred_check_branch
      %34 = sbr.rel (0) target = $region37
    $region36: #{net_forward.1} parent=1 // pred_region
      _
    $region37: #{net_forward.1} parent=1 // pred_fallthru
      _
    // Predicated region
    $region38: #{net_forward.1} parent=1 // pred_check
      _
    $region39: #{net_forward.1} parent=1 // pred_check_branch
      %36 = sbr.rel (0) target = $region41
    $region40: #{net_forward.1} parent=1 // pred_region
      _
    $region41: #{net_forward.1} parent=1 // pred_fallthru
      _
    // Predicated region
    $region42: #{net_forward.1} parent=1 // pred_check
      _
    $region43: #{net_forward.1} parent=1 // pred_check_branch
      %38 = sbr.rel (0) target = $region45
    $region44: #{net_forward.1} parent=1 // pred_region
      _
    $region45: #{net_forward.1} parent=1 // pred_fallthru
      _
    %v40 = vld [vmem:[%s1] sm:$0xff]
    %v41 = vld [vmem:[%s1 + $0x8] sm:$0xff]
    %v42 = vld [vmem:[%s1 + $0x10] sm:$0xff]
    %v43 = vld [vmem:[%s1 + $0x18] sm:$0xff]
    %v44 = vld [vmem:[%s1 + $0x20] sm:$0xff]
    %v45 = vld [vmem:[%s1 + $0x28] sm:$0xff]
    %v46 = vld [vmem:[%s1 + $0x30] sm:$0xff]
    %v47 = vld [vmem:[%s1 + $0x38] sm:$0xff]
    %v48 = vld [vmem:[%s1 + $0x40] sm:$0xff]
    %v49 = vld [vmem:[%s1 + $0x48] sm:$0xff]
    %v50 = vld [vmem:[%s1 + $0x50] sm:$0xff]
    %v51 = vld [vmem:[%s1 + $0x58] sm:$0xff]
    %v52 = vld [vmem:[%s1 + $0x60] sm:$0xff]
    %v53 = vld [vmem:[%s1 + $0x68] sm:$0xff]
    %v54 = vld [vmem:[%s1 + $0x70] sm:$0xff]
    %v55 = vld [vmem:[%s1 + $0x78] sm:$0xff]
    %v56 = vld [vmem:[%s1 + $0x80] sm:$0xff]
    %v57 = vld [vmem:[%s1 + $0x88] sm:$0xff]
    %v58 = vld [vmem:[%s1 + $0x90] sm:$0xff]
    %v59 = vld [vmem:[%s1 + $0x98] sm:$0xff]
    %v60 = vld [vmem:[%s1 + $0xa0] sm:$0xff]
    %v61 = vld [vmem:[%s1 + $0xa8] sm:$0xff]
    %v62 = vld [vmem:[%s1 + $0xb0] sm:$0xff]
    %v63 = vld [vmem:[%s1 + $0xb8] sm:$0xff]
    %v64 = vld [vmem:[%s1 + $0xc0] sm:$0xff]
    %v65 = vld [vmem:[%s1 + $0xc8] sm:$0xff]
    %v66 = vld [vmem:[%s1 + $0xd0] sm:$0xff]
    %v67 = vld [vmem:[%s1 + $0xd8] sm:$0xff]
    %v68 = vld [vmem:[%s1 + $0xe0] sm:$0xff]
    %v69 = vld [vmem:[%s1 + $0xe8] sm:$0xff]
    %v70 = vld [vmem:[%s1 + $0xf0] sm:$0xff]
    %v71 = vld [vmem:[%s1 + $0xf8] sm:$0xff]
    %v72 = vld [vmem:[%s1 + $0x100] sm:$0xff]
    %v73 = vld [vmem:[%s1 + $0x108] sm:$0xff]
    %v74 = vld [vmem:[%s1 + $0x110] sm:$0xff]
    %v75 = vld [vmem:[%s1 + $0x118] sm:$0xff]
    %v76 = vld [vmem:[%s1 + $0x120] sm:$0xff]
    %v77 = vld [vmem:[%s1 + $0x128] sm:$0xff]
    %v78 = vld [vmem:[%s1 + $0x130] sm:$0xff]
    %v79 = vld [vmem:[%s1 + $0x138] sm:$0xff]
    %v80 = vld [vmem:[%s1 + $0x140] sm:$0xff]
    %v81 = vld [vmem:[%s1 + $0x148] sm:$0xff]
    %v82 = vld [vmem:[%s1 + $0x150] sm:$0xff]
    %v83 = vld [vmem:[%s1 + $0x158] sm:$0xff]
    %v84 = vld [vmem:[%s1 + $0x160] sm:$0xff]
    %v85 = vld [vmem:[%s1 + $0x168] sm:$0xff]
    %v86 = vld [vmem:[%s1 + $0x170] sm:$0xff]
    %v87 = vld [vmem:[%s1 + $0x178] sm:$0xff]
    %v88 = vld [vmem:[%s1 + $0x180] sm:$0xff]
    %v89 = vld [vmem:[%s1 + $0x188] sm:$0xff]
    %v90 = vld [vmem:[%s1 + $0x190] sm:$0xff]
    %v91 = vld [vmem:[%s1 + $0x198] sm:$0xff]
    %v92 = vld [vmem:[%s1 + $0x1a0] sm:$0xff]
    %v93 = vld [vmem:[%s1 + $0x1a8] sm:$0xff]
    %v94 = vld [vmem:[%s1 + $0x1b0] sm:$0xff]
    %v95 = vld [vmem:[%s1 + $0x1b8] sm:$0xff]
    %v96 = vld [vmem:[%s1 + $0x1c0] sm:$0xff]
    %v97 = vld [vmem:[%s1 + $0x1c8] sm:$0xff]
    %v98 = vld [vmem:[%s1 + $0x1d0] sm:$0xff]
    %v99 = vld [vmem:[%s1 + $0x1d8] sm:$0xff]
    %v100 = vld [vmem:[%s2] sm:$0x3]
    %v101 = vld [vmem:[%s0] sm:$0xff]
    %v102 = vld [vmem:[%s0 + $0x8] sm:$0xff]
    %v103 = vld [vmem:[%s0 + $0x10] sm:$0x77]
    %v104 = vld [vmem:[%s0 + $0x18] sm:$0x77]
    %v106 = vlaneseq
    %v107 = vshrl.u32 %v106, 7
    %v108 = vsub.s32 0, %v107
    %v109 = vrot.slane %v100, %v108
    %v110 = vlaneseq
    %v111 = vshrl.u32 %v110, 7
    %v112 = vsub.s32 1, %v111
    %v113 = vrot.slane %v100, %v112
    %v120 = vunpack.c.l.b16 %v101
    %v121 = vunpack.c.h.b16 %v101
    %v122 = vunpack.c.l.b16 %v102
    %v123 = vunpack.c.h.b16 %v102
    %v124 = vunpack.c.l.b16 %v103
    %v125 = vunpack.c.h.b16 %v103
    %v126 = vunpack.c.l.b16 %v104
    %v127 = vunpack.c.h.b16 %v104
    %v128 = vpack.c.b16 %v124, %v120
    %v129 = vpack.c.b16 %v125, %v121
    %v130 = vpack.c.b16 %v126, %v122
    %v131 = vpack.c.b16 %v127, %v123
    %v195 = vunpack.c.l.b16 %v40
    %v196 = vunpack.c.h.b16 %v40
    %v197 = vunpack.c.l.b16 %v41
    %v198 = vunpack.c.h.b16 %v41
    %v199 = vunpack.c.l.b16 %v42
    %v200 = vunpack.c.h.b16 %v42
    %v201 = vunpack.c.l.b16 %v43
    %v202 = vunpack.c.h.b16 %v43
    %v203 = vunpack.c.l.b16 %v44
    %v204 = vunpack.c.h.b16 %v44
    %v205 = vunpack.c.l.b16 %v45
    %v206 = vunpack.c.h.b16 %v45
    %v207 = vunpack.c.l.b16 %v46
    %v208 = vunpack.c.h.b16 %v46
    %v209 = vunpack.c.l.b16 %v47
    %v210 = vunpack.c.h.b16 %v47
    %v211 = vunpack.c.l.b16 %v48
    %v212 = vunpack.c.h.b16 %v48
    %v213 = vunpack.c.l.b16 %v49
    %v214 = vunpack.c.h.b16 %v49
    %v215 = vunpack.c.l.b16 %v50
    %v216 = vunpack.c.h.b16 %v50
    %v217 = vunpack.c.l.b16 %v51
    %v218 = vunpack.c.h.b16 %v51
    %v219 = vunpack.c.l.b16 %v52
    %v220 = vunpack.c.h.b16 %v52
    %v221 = vunpack.c.l.b16 %v53
    %v222 = vunpack.c.h.b16 %v53
    %v223 = vunpack.c.l.b16 %v54
    %v224 = vunpack.c.h.b16 %v54
    %v225 = vunpack.c.l.b16 %v55
    %v226 = vunpack.c.h.b16 %v55
    %v227 = vunpack.c.l.b16 %v56
    %v228 = vunpack.c.h.b16 %v56
    %v229 = vunpack.c.l.b16 %v57
    %v230 = vunpack.c.h.b16 %v57
    %v231 = vunpack.c.l.b16 %v58
    %v232 = vunpack.c.h.b16 %v58
    %v233 = vunpack.c.l.b16 %v59
    %v234 = vunpack.c.h.b16 %v59
    %v235 = vunpack.c.l.b16 %v60
    %v236 = vunpack.c.h.b16 %v60
    %v237 = vunpack.c.l.b16 %v61
    %v238 = vunpack.c.h.b16 %v61
    %v239 = vunpack.c.l.b16 %v62
    %v240 = vunpack.c.h.b16 %v62
    %v241 = vunpack.c.l.b16 %v63
    %v242 = vunpack.c.h.b16 %v63
    %v243 = vunpack.c.l.b16 %v64
    %v244 = vunpack.c.h.b16 %v64
    %v245 = vunpack.c.l.b16 %v65
    %v246 = vunpack.c.h.b16 %v65
    %v247 = vunpack.c.l.b16 %v66
    %v248 = vunpack.c.h.b16 %v66
    %v249 = vunpack.c.l.b16 %v67
    %v250 = vunpack.c.h.b16 %v67
    %v251 = vunpack.c.l.b16 %v68
    %v252 = vunpack.c.h.b16 %v68
    %v253 = vunpack.c.l.b16 %v69
    %v254 = vunpack.c.h.b16 %v69
    %v255 = vunpack.c.l.b16 %v70
    %v256 = vunpack.c.h.b16 %v70
    %v257 = vunpack.c.l.b16 %v71
    %v258 = vunpack.c.h.b16 %v71
    %v259 = vunpack.c.l.b16 %v72
    %v260 = vunpack.c.h.b16 %v72
    %v261 = vunpack.c.l.b16 %v73
    %v262 = vunpack.c.h.b16 %v73
    %v263 = vunpack.c.l.b16 %v74
    %v264 = vunpack.c.h.b16 %v74
    %v265 = vunpack.c.l.b16 %v75
    %v266 = vunpack.c.h.b16 %v75
    %v267 = vunpack.c.l.b16 %v76
    %v268 = vunpack.c.h.b16 %v76
    %v269 = vunpack.c.l.b16 %v77
    %v270 = vunpack.c.h.b16 %v77
    %v271 = vunpack.c.l.b16 %v78
    %v272 = vunpack.c.h.b16 %v78
    %v273 = vunpack.c.l.b16 %v79
    %v274 = vunpack.c.h.b16 %v79
    %v275 = vunpack.c.l.b16 %v80
    %v276 = vunpack.c.h.b16 %v80
    %v277 = vunpack.c.l.b16 %v81
    %v278 = vunpack.c.h.b16 %v81
    %v279 = vunpack.c.l.b16 %v82
    %v280 = vunpack.c.h.b16 %v82
    %v281 = vunpack.c.l.b16 %v83
    %v282 = vunpack.c.h.b16 %v83
    %v283 = vunpack.c.l.b16 %v84
    %v284 = vunpack.c.h.b16 %v84
    %v285 = vunpack.c.l.b16 %v85
    %v286 = vunpack.c.h.b16 %v85
    %v287 = vunpack.c.l.b16 %v86
    %v288 = vunpack.c.h.b16 %v86
    %v289 = vunpack.c.l.b16 %v87
    %v290 = vunpack.c.h.b16 %v87
    %v291 = vunpack.c.l.b16 %v88
    %v292 = vunpack.c.h.b16 %v88
    %v293 = vunpack.c.l.b16 %v89
    %v294 = vunpack.c.h.b16 %v89
    %v295 = vunpack.c.l.b16 %v90
    %v296 = vunpack.c.h.b16 %v90
    %v297 = vunpack.c.l.b16 %v91
    %v298 = vunpack.c.h.b16 %v91
    %v299 = vunpack.c.l.b16 %v92
    %v300 = vunpack.c.h.b16 %v92
    %v301 = vunpack.c.l.b16 %v93
    %v302 = vunpack.c.h.b16 %v93
    %v303 = vunpack.c.l.b16 %v94
    %v304 = vunpack.c.h.b16 %v94
    %v305 = vunpack.c.l.b16 %v95
    %v306 = vunpack.c.h.b16 %v95
    %v307 = vunpack.c.l.b16 %v96
    %v308 = vunpack.c.h.b16 %v96
    %v309 = vunpack.c.l.b16 %v97
    %v310 = vunpack.c.h.b16 %v97
    %v311 = vunpack.c.l.b16 %v98
    %v312 = vunpack.c.h.b16 %v98
    %v313 = vunpack.c.l.b16 %v99
    %v314 = vunpack.c.h.b16 %v99
    %v315 = vpack.c.b16 %v197, %v195
    %v316 = vpack.c.b16 %v198, %v196
    %v317 = vpack.c.b16 %v201, %v199
    %v318 = vpack.c.b16 %v202, %v200
    %v319 = vpack.c.b16 %v205, %v203
    %v320 = vpack.c.b16 %v206, %v204
    %v321 = vpack.c.b16 %v209, %v207
    %v322 = vpack.c.b16 %v210, %v208
    %v323 = vpack.c.b16 %v213, %v211
    %v324 = vpack.c.b16 %v214, %v212
    %v325 = vpack.c.b16 %v217, %v215
    %v326 = vpack.c.b16 %v218, %v216
    %v327 = vpack.c.b16 %v221, %v219
    %v328 = vpack.c.b16 %v222, %v220
    %v329 = vpack.c.b16 %v225, %v223
    %v330 = vpack.c.b16 %v226, %v224
    %v331 = vpack.c.b16 %v229, %v227
    %v332 = vpack.c.b16 %v230, %v228
    %v333 = vpack.c.b16 %v233, %v231
    %v334 = vpack.c.b16 %v234, %v232
    %v335 = vpack.c.b16 %v237, %v235
    %v336 = vpack.c.b16 %v238, %v236
    %v337 = vpack.c.b16 %v241, %v239
    %v338 = vpack.c.b16 %v242, %v240
    %v339 = vpack.c.b16 %v245, %v243
    %v340 = vpack.c.b16 %v246, %v244
    %v341 = vpack.c.b16 %v249, %v247
    %v342 = vpack.c.b16 %v250, %v248
    %v343 = vpack.c.b16 %v253, %v251
    %v344 = vpack.c.b16 %v254, %v252
    %v345 = vpack.c.b16 %v257, %v255
    %v346 = vpack.c.b16 %v258, %v256
    %v347 = vpack.c.b16 %v261, %v259
    %v348 = vpack.c.b16 %v262, %v260
    %v349 = vpack.c.b16 %v265, %v263
    %v350 = vpack.c.b16 %v266, %v264
    %v351 = vpack.c.b16 %v269, %v267
    %v352 = vpack.c.b16 %v270, %v268
    %v353 = vpack.c.b16 %v273, %v271
    %v354 = vpack.c.b16 %v274, %v272
    %v355 = vpack.c.b16 %v277, %v275
    %v356 = vpack.c.b16 %v278, %v276
    %v357 = vpack.c.b16 %v281, %v279
    %v358 = vpack.c.b16 %v282, %v280
    %v359 = vpack.c.b16 %v285, %v283
    %v360 = vpack.c.b16 %v286, %v284
    %v361 = vpack.c.b16 %v289, %v287
    %v362 = vpack.c.b16 %v290, %v288
    %v363 = vpack.c.b16 %v293, %v291
    %v364 = vpack.c.b16 %v294, %v292
    %v365 = vpack.c.b16 %v297, %v295
    %v366 = vpack.c.b16 %v298, %v296
    %v367 = vpack.c.b16 %v301, %v299
    %v368 = vpack.c.b16 %v302, %v300
    %v369 = vpack.c.b16 %v305, %v303
    %v370 = vpack.c.b16 %v306, %v304
    %v371 = vpack.c.b16 %v309, %v307
    %v372 = vpack.c.b16 %v310, %v308
    %v373 = vpack.c.b16 %v313, %v311
    %v374 = vpack.c.b16 %v314, %v312
    %vm435 = vcmask 785408
    %v437 = vsel %vm435, %v131, 0
    %439 = vmatprep.subr.bf16.mxu0 %v330
    %440 = vmatpush1.bf16.msra.mxu0 %v329
    %441 = vmatprep.subr.bf16.mxu0 %v328
    %442 = vmatpush1.bf16.msra.mxu0 %v327
    %443 = vmatprep.subr.bf16.mxu0 %v326
    %444 = vmatpush1.bf16.msra.mxu0 %v325
    %445 = vmatprep.subr.bf16.mxu0 %v324
    %446 = vmatpush1.bf16.msra.mxu0 %v323
    %447 = vmatprep.subr.bf16.mxu0 %v322
    %448 = vmatpush1.bf16.msra.mxu0 %v321
    %449 = vmatprep.subr.bf16.mxu0 %v320
    %450 = vmatpush1.bf16.msra.mxu0 %v319
    %451 = vmatprep.subr.bf16.mxu0 %v318
    %452 = vmatpush1.bf16.msra.mxu0 %v317
    %453 = vmatprep.subr.bf16.mxu0 %v316
    %454 = vmatpush1.bf16.msra.mxu0 %v315
    %455 = vmatprep.subr.bf16.mxu0 %v346
    %456 = vmatpush2.bf16.msra.mxu0 %v345
    %457 = vmatprep.subr.bf16.mxu0 %v344
    %458 = vmatpush2.bf16.msra.mxu0 %v343
    %459 = vmatprep.subr.bf16.mxu0 %v342
    %460 = vmatpush2.bf16.msra.mxu0 %v341
    %461 = vmatprep.subr.bf16.mxu0 %v340
    %462 = vmatpush2.bf16.msra.mxu0 %v339
    %463 = vmatprep.subr.bf16.mxu0 %v338
    %464 = vmatpush2.bf16.msra.mxu0 %v337
    %465 = vmatprep.subr.bf16.mxu0 %v336
    %466 = vmatpush2.bf16.msra.mxu0 %v335
    %467 = vmatprep.subr.bf16.mxu0 %v334
    %468 = vmatpush2.bf16.msra.mxu0 %v333
    %469 = vmatprep.subr.bf16.mxu0 %v332
    %470 = vmatpush2.bf16.msra.mxu0 %v331
    %471 = vmatprep.mubr.bf16.mxu0 %v129
    %472 = vmatmul.mubr.bf16.gmra.mxu0 %v128
    %v473 = vpop.f32.mrf.mxu0
    %v474 = vadd.f32 %v109, %v473
    %v475 = vpop.f32.mrf.mxu0
    %v476 = vadd.f32 %v113, %v475
    %v477 = vpop.f32.mrf.mxu0
    %v478 = vadd.f32 %v109, %v477
    %v479 = vpop.f32.mrf.mxu0
    %v480 = vadd.f32 %v113, %v479
    %481 = vdwg.mxu0
    %482 = vmatprep.subr.bf16.mxu0 %v362
    %483 = vmatpush1.bf16.msra.mxu0 %v361
    %484 = vmatprep.subr.bf16.mxu0 %v360
    %485 = vmatpush1.bf16.msra.mxu0 %v359
    %486 = vmatprep.subr.bf16.mxu0 %v358
    %487 = vmatpush1.bf16.msra.mxu0 %v357
    %488 = vmatprep.subr.bf16.mxu0 %v356
    %489 = vmatpush1.bf16.msra.mxu0 %v355
    %490 = vmatprep.subr.bf16.mxu0 %v354
    %491 = vmatpush1.bf16.msra.mxu0 %v353
    %492 = vmatprep.subr.bf16.mxu0 %v352
    %493 = vmatpush1.bf16.msra.mxu0 %v351
    %494 = vmatprep.subr.bf16.mxu0 %v350
    %495 = vmatpush1.bf16.msra.mxu0 %v349
    %496 = vmatprep.subr.bf16.mxu0 %v348
    %497 = vmatpush1.bf16.msra.mxu0 %v347
    %498 = vmatprep.subr.bf16.mxu0 0
    %499 = vmatpush2.bf16.msra.mxu0 0
    %500 = vmatprep.subr.bf16.mxu0 0
    %501 = vmatpush2.bf16.msra.mxu0 0
    %502 = vmatprep.subr.bf16.mxu0 %v374
    %503 = vmatpush2.bf16.msra.mxu0 %v373
    %504 = vmatprep.subr.bf16.mxu0 %v372
    %505 = vmatpush2.bf16.msra.mxu0 %v371
    %506 = vmatprep.subr.bf16.mxu0 %v370
    %507 = vmatpush2.bf16.msra.mxu0 %v369
    %508 = vmatprep.subr.bf16.mxu0 %v368
    %509 = vmatpush2.bf16.msra.mxu0 %v367
    %510 = vmatprep.subr.bf16.mxu0 %v366
    %511 = vmatpush2.bf16.msra.mxu0 %v365
    %512 = vmatprep.subr.bf16.mxu0 %v364
    %513 = vmatpush2.bf16.msra.mxu0 %v363
    %514 = vmatprep.mubr.bf16.mxu0 %v437
    %515 = vmatmul.mubr.bf16.gmra.mxu0 %v130
    %v516 = vpop.f32.mrf.mxu0
    %v517 = vadd.f32 %v474, %v516
    %v518 = vpop.f32.mrf.mxu0
    %v519 = vadd.f32 %v476, %v518
    %v520 = vpop.f32.mrf.mxu0
    %v521 = vadd.f32 %v478, %v520
    %v522 = vpop.f32.mrf.mxu0
    %v523 = vadd.f32 %v480, %v522
    %524 = vdwg.mxu0
    %v525 = vmax.f32 %v517, 0.0
    %v526 = vmax.f32 %v519, 0.0
    %v527 = vmax.f32 %v521, 0.0
    %v528 = vmax.f32 %v523, 0.0
    %s529 = scalar_lea.vmem %s0, 32
    %v530 = vld [vmem:[%s529] sm:$0xff]
    %v531 = vld [vmem:[%s529 + $0x8] sm:$0xff]
    %v532 = vld [vmem:[%s529 + $0x10] sm:$0x77]
    %v533 = vld [vmem:[%s529 + $0x18] sm:$0x77]
    %v538 = vunpack.c.l.b16 %v530
    %v539 = vunpack.c.h.b16 %v530
    %v540 = vunpack.c.l.b16 %v531
    %v541 = vunpack.c.h.b16 %v531
    %v542 = vunpack.c.l.b16 %v532
    %v543 = vunpack.c.h.b16 %v532
    %v544 = vunpack.c.l.b16 %v533
    %v545 = vunpack.c.h.b16 %v533
    %v546 = vpack.c.b16 %v542, %v538
    %v547 = vpack.c.b16 %v543, %v539
    %v548 = vpack.c.b16 %v544, %v540
    %v549 = vpack.c.b16 %v545, %v541
    %v554 = vsel %vm435, %v549, 0
    %556 = vmatprep.subr.bf16.mxu0 %v330
    %557 = vmatpush1.bf16.msra.mxu0 %v329
    %558 = vmatprep.subr.bf16.mxu0 %v328
    %559 = vmatpush1.bf16.msra.mxu0 %v327
    %560 = vmatprep.subr.bf16.mxu0 %v326
    %561 = vmatpush1.bf16.msra.mxu0 %v325
    %562 = vmatprep.subr.bf16.mxu0 %v324
    %563 = vmatpush1.bf16.msra.mxu0 %v323
    %564 = vmatprep.subr.bf16.mxu0 %v322
    %565 = vmatpush1.bf16.msra.mxu0 %v321
    %566 = vmatprep.subr.bf16.mxu0 %v320
    %567 = vmatpush1.bf16.msra.mxu0 %v319
    %568 = vmatprep.subr.bf16.mxu0 %v318
    %569 = vmatpush1.bf16.msra.mxu0 %v317
    %570 = vmatprep.subr.bf16.mxu0 %v316
    %571 = vmatpush1.bf16.msra.mxu0 %v315
    %572 = vmatprep.subr.bf16.mxu0 %v346
    %573 = vmatpush2.bf16.msra.mxu0 %v345
    %574 = vmatprep.subr.bf16.mxu0 %v344
    %575 = vmatpush2.bf16.msra.mxu0 %v343
    %576 = vmatprep.subr.bf16.mxu0 %v342
    %577 = vmatpush2.bf16.msra.mxu0 %v341
    %578 = vmatprep.subr.bf16.mxu0 %v340
    %579 = vmatpush2.bf16.msra.mxu0 %v339
    %580 = vmatprep.subr.bf16.mxu0 %v338
    %581 = vmatpush2.bf16.msra.mxu0 %v337
    %582 = vmatprep.subr.bf16.mxu0 %v336
    %583 = vmatpush2.bf16.msra.mxu0 %v335
    %584 = vmatprep.subr.bf16.mxu0 %v334
    %585 = vmatpush2.bf16.msra.mxu0 %v333
    %586 = vmatprep.subr.bf16.mxu0 %v332
    %587 = vmatpush2.bf16.msra.mxu0 %v331
    %588 = vmatprep.mubr.bf16.mxu0 %v547
    %589 = vmatmul.mubr.bf16.gmra.mxu0 %v546
    %v590 = vpop.f32.mrf.mxu0
    %v591 = vadd.f32 %v109, %v590
    %v592 = vpop.f32.mrf.mxu0
    %v593 = vadd.f32 %v113, %v592
    %v594 = vpop.f32.mrf.mxu0
    %v595 = vadd.f32 %v109, %v594
    %v596 = vpop.f32.mrf.mxu0
    %v597 = vadd.f32 %v113, %v596
    %598 = vdwg.mxu0
    %599 = vmatprep.subr.bf16.mxu0 %v362
    %600 = vmatpush1.bf16.msra.mxu0 %v361
    %601 = vmatprep.subr.bf16.mxu0 %v360
    %602 = vmatpush1.bf16.msra.mxu0 %v359
    %603 = vmatprep.subr.bf16.mxu0 %v358
    %604 = vmatpush1.bf16.msra.mxu0 %v357
    %605 = vmatprep.subr.bf16.mxu0 %v356
    %606 = vmatpush1.bf16.msra.mxu0 %v355
    %607 = vmatprep.subr.bf16.mxu0 %v354
    %608 = vmatpush1.bf16.msra.mxu0 %v353
    %609 = vmatprep.subr.bf16.mxu0 %v352
    %610 = vmatpush1.bf16.msra.mxu0 %v351
    %611 = vmatprep.subr.bf16.mxu0 %v350
    %612 = vmatpush1.bf16.msra.mxu0 %v349
    %613 = vmatprep.subr.bf16.mxu0 %v348
    %614 = vmatpush1.bf16.msra.mxu0 %v347
    %615 = vmatprep.subr.bf16.mxu0 0
    %616 = vmatpush2.bf16.msra.mxu0 0
    %617 = vmatprep.subr.bf16.mxu0 0
    %618 = vmatpush2.bf16.msra.mxu0 0
    %619 = vmatprep.subr.bf16.mxu0 %v374
    %620 = vmatpush2.bf16.msra.mxu0 %v373
    %621 = vmatprep.subr.bf16.mxu0 %v372
    %622 = vmatpush2.bf16.msra.mxu0 %v371
    %623 = vmatprep.subr.bf16.mxu0 %v370
    %624 = vmatpush2.bf16.msra.mxu0 %v369
    %625 = vmatprep.subr.bf16.mxu0 %v368
    %626 = vmatpush2.bf16.msra.mxu0 %v367
    %627 = vmatprep.subr.bf16.mxu0 %v366
    %628 = vmatpush2.bf16.msra.mxu0 %v365
    %629 = vmatprep.subr.bf16.mxu0 %v364
    %630 = vmatpush2.bf16.msra.mxu0 %v363
    %631 = vmatprep.mubr.bf16.mxu0 %v554
    %632 = vmatmul.mubr.bf16.gmra.mxu0 %v548
    %v633 = vpop.f32.mrf.mxu0
    %v634 = vadd.f32 %v591, %v633
    %v635 = vpop.f32.mrf.mxu0
    %v636 = vadd.f32 %v593, %v635
    %v637 = vpop.f32.mrf.mxu0
    %v638 = vadd.f32 %v595, %v637
    %v639 = vpop.f32.mrf.mxu0
    %v640 = vadd.f32 %v597, %v639
    %641 = vdwg.mxu0
    %v642 = vmax.f32 %v634, 0.0
    %v643 = vmax.f32 %v636, 0.0
    %v644 = vmax.f32 %v638, 0.0
    %v645 = vmax.f32 %v640, 0.0
    %v646 = vmax.f32 %v525, %v642
    %v647 = vmax.f32 %v526, %v643
    %v648 = vmax.f32 %v527, %v644
    %v649 = vmax.f32 %v528, %v645
    %v650 = vmax.f32 %v646, %v647
    %v651 = vmax.f32 %v648, %v649
    %652 = vst [vmem:[#allocation2] sm:$0xff] %v650
    %653 = vst [vmem:[#allocation2 + $0x8] sm:$0x3f] %v651
    %s654 = scalar_lea.vmem %s0, 64
    %v655 = vld [vmem:[%s654] sm:$0xff]
    %v656 = vld [vmem:[%s654 + $0x8] sm:$0xff]
    %v657 = vld [vmem:[%s654 + $0x10] sm:$0x77]
    %v658 = vld [vmem:[%s654 + $0x18] sm:$0x77]
    %v663 = vunpack.c.l.b16 %v655
    %v664 = vunpack.c.h.b16 %v655
    %v665 = vunpack.c.l.b16 %v656
    %v666 = vunpack.c.h.b16 %v656
    %v667 = vunpack.c.l.b16 %v657
    %v668 = vunpack.c.h.b16 %v657
    %v669 = vunpack.c.l.b16 %v658
    %v670 = vunpack.c.h.b16 %v658
    %v671 = vpack.c.b16 %v667, %v663
    %v672 = vpack.c.b16 %v668, %v664
    %v673 = vpack.c.b16 %v669, %v665
    %v674 = vpack.c.b16 %v670, %v666
    %v679 = vsel %vm435, %v674, 0
    %681 = vmatprep.subr.bf16.mxu0 %v330
    %682 = vmatpush1.bf16.msra.mxu0 %v329
    %683 = vmatprep.subr.bf16.mxu0 %v328
    %684 = vmatpush1.bf16.msra.mxu0 %v327
    %685 = vmatprep.subr.bf16.mxu0 %v326
    %686 = vmatpush1.bf16.msra.mxu0 %v325
    %687 = vmatprep.subr.bf16.mxu0 %v324
    %688 = vmatpush1.bf16.msra.mxu0 %v323
    %689 = vmatprep.subr.bf16.mxu0 %v322
    %690 = vmatpush1.bf16.msra.mxu0 %v321
    %691 = vmatprep.subr.bf16.mxu0 %v320
    %692 = vmatpush1.bf16.msra.mxu0 %v319
    %693 = vmatprep.subr.bf16.mxu0 %v318
    %694 = vmatpush1.bf16.msra.mxu0 %v317
    %695 = vmatprep.subr.bf16.mxu0 %v316
    %696 = vmatpush1.bf16.msra.mxu0 %v315
    %697 = vmatprep.subr.bf16.mxu0 %v346
    %698 = vmatpush2.bf16.msra.mxu0 %v345
    %699 = vmatprep.subr.bf16.mxu0 %v344
    %700 = vmatpush2.bf16.msra.mxu0 %v343
    %701 = vmatprep.subr.bf16.mxu0 %v342
    %702 = vmatpush2.bf16.msra.mxu0 %v341
    %703 = vmatprep.subr.bf16.mxu0 %v340
    %704 = vmatpush2.bf16.msra.mxu0 %v339
    %705 = vmatprep.subr.bf16.mxu0 %v338
    %706 = vmatpush2.bf16.msra.mxu0 %v337
    %707 = vmatprep.subr.bf16.mxu0 %v336
    %708 = vmatpush2.bf16.msra.mxu0 %v335
    %709 = vmatprep.subr.bf16.mxu0 %v334
    %710 = vmatpush2.bf16.msra.mxu0 %v333
    %711 = vmatprep.subr.bf16.mxu0 %v332
    %712 = vmatpush2.bf16.msra.mxu0 %v331
    %713 = vmatprep.mubr.bf16.mxu0 %v672
    %714 = vmatmul.mubr.bf16.gmra.mxu0 %v671
    %v715 = vpop.f32.mrf.mxu0
    %v716 = vadd.f32 %v109, %v715
    %v717 = vpop.f32.mrf.mxu0
    %v718 = vadd.f32 %v113, %v717
    %v719 = vpop.f32.mrf.mxu0
    %v720 = vadd.f32 %v109, %v719
    %v721 = vpop.f32.mrf.mxu0
    %v722 = vadd.f32 %v113, %v721
    %723 = vdwg.mxu0
    %724 = vmatprep.subr.bf16.mxu0 %v362
    %725 = vmatpush1.bf16.msra.mxu0 %v361
    %726 = vmatprep.subr.bf16.mxu0 %v360
    %727 = vmatpush1.bf16.msra.mxu0 %v359
    %728 = vmatprep.subr.bf16.mxu0 %v358
    %729 = vmatpush1.bf16.msra.mxu0 %v357
    %730 = vmatprep.subr.bf16.mxu0 %v356
    %731 = vmatpush1.bf16.msra.mxu0 %v355
    %732 = vmatprep.subr.bf16.mxu0 %v354
    %733 = vmatpush1.bf16.msra.mxu0 %v353
    %734 = vmatprep.subr.bf16.mxu0 %v352
    %735 = vmatpush1.bf16.msra.mxu0 %v351
    %736 = vmatprep.subr.bf16.mxu0 %v350
    %737 = vmatpush1.bf16.msra.mxu0 %v349
    %738 = vmatprep.subr.bf16.mxu0 %v348
    %739 = vmatpush1.bf16.msra.mxu0 %v347
    %740 = vmatprep.subr.bf16.mxu0 0
    %741 = vmatpush2.bf16.msra.mxu0 0
    %742 = vmatprep.subr.bf16.mxu0 0
    %743 = vmatpush2.bf16.msra.mxu0 0
    %744 = vmatprep.subr.bf16.mxu0 %v374
    %745 = vmatpush2.bf16.msra.mxu0 %v373
    %746 = vmatprep.subr.bf16.mxu0 %v372
    %747 = vmatpush2.bf16.msra.mxu0 %v371
    %748 = vmatprep.subr.bf16.mxu0 %v370
    %749 = vmatpush2.bf16.msra.mxu0 %v369
    %750 = vmatprep.subr.bf16.mxu0 %v368
    %751 = vmatpush2.bf16.msra.mxu0 %v367
    %752 = vmatprep.subr.bf16.mxu0 %v366
    %753 = vmatpush2.bf16.msra.mxu0 %v365
    %754 = vmatprep.subr.bf16.mxu0 %v364
    %755 = vmatpush2.bf16.msra.mxu0 %v363
    %756 = vmatprep.mubr.bf16.mxu0 %v679
    %757 = vmatmul.mubr.bf16.gmra.mxu0 %v673
    %v758 = vpop.f32.mrf.mxu0
    %v759 = vadd.f32 %v716, %v758
    %v760 = vpop.f32.mrf.mxu0
    %v761 = vadd.f32 %v718, %v760
    %v762 = vpop.f32.mrf.mxu0
    %v763 = vadd.f32 %v720, %v762
    %v764 = vpop.f32.mrf.mxu0
    %v765 = vadd.f32 %v722, %v764
    %766 = vdwg.mxu0
    %v767 = vmax.f32 %v759, 0.0
    %v768 = vmax.f32 %v761, 0.0
    %v769 = vmax.f32 %v763, 0.0
    %v770 = vmax.f32 %v765, 0.0
    %s771 = scalar_lea.vmem %s0, 96
    %v772 = vld [vmem:[%s771] sm:$0xff]
    %v773 = vld [vmem:[%s771 + $0x8] sm:$0xff]
    %v774 = vld [vmem:[%s771 + $0x10] sm:$0x77]
    %v775 = vld [vmem:[%s771 + $0x18] sm:$0x77]
    %v780 = vunpack.c.l.b16 %v772
    %v781 = vunpack.c.h.b16 %v772
    %v782 = vunpack.c.l.b16 %v773
    %v783 = vunpack.c.h.b16 %v773
    %v784 = vunpack.c.l.b16 %v774
    %v785 = vunpack.c.h.b16 %v774
    %v786 = vunpack.c.l.b16 %v775
    %v787 = vunpack.c.h.b16 %v775
    %v788 = vpack.c.b16 %v784, %v780
    %v789 = vpack.c.b16 %v785, %v781
    %v790 = vpack.c.b16 %v786, %v782
    %v791 = vpack.c.b16 %v787, %v783
    %v796 = vsel %vm435, %v791, 0
    %798 = vmatprep.subr.bf16.mxu0 %v330
    %799 = vmatpush1.bf16.msra.mxu0 %v329
    %800 = vmatprep.subr.bf16.mxu0 %v328
    %801 = vmatpush1.bf16.msra.mxu0 %v327
    %802 = vmatprep.subr.bf16.mxu0 %v326
    %803 = vmatpush1.bf16.msra.mxu0 %v325
    %804 = vmatprep.subr.bf16.mxu0 %v324
    %805 = vmatpush1.bf16.msra.mxu0 %v323
    %806 = vmatprep.subr.bf16.mxu0 %v322
    %807 = vmatpush1.bf16.msra.mxu0 %v321
    %808 = vmatprep.subr.bf16.mxu0 %v320
    %809 = vmatpush1.bf16.msra.mxu0 %v319
    %810 = vmatprep.subr.bf16.mxu0 %v318
    %811 = vmatpush1.bf16.msra.mxu0 %v317
    %812 = vmatprep.subr.bf16.mxu0 %v316
    %813 = vmatpush1.bf16.msra.mxu0 %v315
    %814 = vmatprep.subr.bf16.mxu0 %v346
    %815 = vmatpush2.bf16.msra.mxu0 %v345
    %816 = vmatprep.subr.bf16.mxu0 %v344
    %817 = vmatpush2.bf16.msra.mxu0 %v343
    %818 = vmatprep.subr.bf16.mxu0 %v342
    %819 = vmatpush2.bf16.msra.mxu0 %v341
    %820 = vmatprep.subr.bf16.mxu0 %v340
    %821 = vmatpush2.bf16.msra.mxu0 %v339
    %822 = vmatprep.subr.bf16.mxu0 %v338
    %823 = vmatpush2.bf16.msra.mxu0 %v337
    %824 = vmatprep.subr.bf16.mxu0 %v336
    %825 = vmatpush2.bf16.msra.mxu0 %v335
    %826 = vmatprep.subr.bf16.mxu0 %v334
    %827 = vmatpush2.bf16.msra.mxu0 %v333
    %828 = vmatprep.subr.bf16.mxu0 %v332
    %829 = vmatpush2.bf16.msra.mxu0 %v331
    %830 = vmatprep.mubr.bf16.mxu0 %v789
    %831 = vmatmul.mubr.bf16.gmra.mxu0 %v788
    %v832 = vpop.f32.mrf.mxu0
    %v833 = vadd.f32 %v109, %v832
    %v834 = vpop.f32.mrf.mxu0
    %v835 = vadd.f32 %v113, %v834
    %v836 = vpop.f32.mrf.mxu0
    %v837 = vadd.f32 %v109, %v836
    %v838 = vpop.f32.mrf.mxu0
    %v839 = vadd.f32 %v113, %v838
    %840 = vdwg.mxu0
    %841 = vmatprep.subr.bf16.mxu0 %v362
    %842 = vmatpush1.bf16.msra.mxu0 %v361
    %843 = vmatprep.subr.bf16.mxu0 %v360
    %844 = vmatpush1.bf16.msra.mxu0 %v359
    %845 = vmatprep.subr.bf16.mxu0 %v358
    %846 = vmatpush1.bf16.msra.mxu0 %v357
    %847 = vmatprep.subr.bf16.mxu0 %v356
    %848 = vmatpush1.bf16.msra.mxu0 %v355
    %849 = vmatprep.subr.bf16.mxu0 %v354
    %850 = vmatpush1.bf16.msra.mxu0 %v353
    %851 = vmatprep.subr.bf16.mxu0 %v352
    %852 = vmatpush1.bf16.msra.mxu0 %v351
    %853 = vmatprep.subr.bf16.mxu0 %v350
    %854 = vmatpush1.bf16.msra.mxu0 %v349
    %855 = vmatprep.subr.bf16.mxu0 %v348
    %856 = vmatpush1.bf16.msra.mxu0 %v347
    %857 = vmatprep.subr.bf16.mxu0 0
    %858 = vmatpush2.bf16.msra.mxu0 0
    %859 = vmatprep.subr.bf16.mxu0 0
    %860 = vmatpush2.bf16.msra.mxu0 0
    %861 = vmatprep.subr.bf16.mxu0 %v374
    %862 = vmatpush2.bf16.msra.mxu0 %v373
    %863 = vmatprep.subr.bf16.mxu0 %v372
    %864 = vmatpush2.bf16.msra.mxu0 %v371
    %865 = vmatprep.subr.bf16.mxu0 %v370
    %866 = vmatpush2.bf16.msra.mxu0 %v369
    %867 = vmatprep.subr.bf16.mxu0 %v368
    %868 = vmatpush2.bf16.msra.mxu0 %v367
    %869 = vmatprep.subr.bf16.mxu0 %v366
    %870 = vmatpush2.bf16.msra.mxu0 %v365
    %871 = vmatprep.subr.bf16.mxu0 %v364
    %872 = vmatpush2.bf16.msra.mxu0 %v363
    %873 = vmatprep.mubr.bf16.mxu0 %v796
    %874 = vmatmul.mubr.bf16.gmra.mxu0 %v790
    %v875 = vpop.f32.mrf.mxu0
    %v876 = vadd.f32 %v833, %v875
    %v877 = vpop.f32.mrf.mxu0
    %v878 = vadd.f32 %v835, %v877
    %v879 = vpop.f32.mrf.mxu0
    %v880 = vadd.f32 %v837, %v879
    %v881 = vpop.f32.mrf.mxu0
    %v882 = vadd.f32 %v839, %v881
    %883 = vdwg.mxu0
    %v884 = vmax.f32 %v876, 0.0
    %v885 = vmax.f32 %v878, 0.0
    %v886 = vmax.f32 %v880, 0.0
    %v887 = vmax.f32 %v882, 0.0
    %v888 = vmax.f32 %v767, %v884
    %v889 = vmax.f32 %v768, %v885
    %v890 = vmax.f32 %v769, %v886
    %v891 = vmax.f32 %v770, %v887
    %v892 = vmax.f32 %v888, %v889
    %v893 = vmax.f32 %v890, %v891
    %894 = vst [vmem:[#allocation3] sm:$0xff] %v892
    %895 = vst [vmem:[#allocation3 + $0x8] sm:$0x3f] %v893
    %v896 = vld [vmem:[%s4] sm:$0x3]
    %v897 = vld [vmem:[#allocation2] sm:$0xff]
    %v898 = vld [vmem:[#allocation2 + $0x8] sm:$0x3]
    %v899 = vpack.c.bf16 %v898, %v897
    %v900 = vld [vmem:[%s3] sm:$0xff]
    %v901 = vld [vmem:[%s3 + $0x8] sm:$0xff]
    %v902 = vld [vmem:[%s3 + $0x10] sm:$0xff]
    %v903 = vld [vmem:[%s3 + $0x18] sm:$0xff]
    %v904 = vld [vmem:[%s3 + $0x20] sm:$0xff]
    %v905 = vld [vmem:[%s3 + $0x28] sm:$0xff]
    %v906 = vld [vmem:[%s3 + $0x30] sm:$0xff]
    %v907 = vld [vmem:[%s3 + $0x38] sm:$0xff]
    %v908 = vld [vmem:[%s3 + $0x40] sm:$0xff]
    %v909 = vld [vmem:[%s3 + $0x48] sm:$0xff]
    %v910 = vld [vmem:[%s3 + $0x50] sm:$0xff]
    %v911 = vld [vmem:[%s3 + $0x58] sm:$0xff]
    %v912 = vld [vmem:[%s3 + $0x60] sm:$0xff]
    %v913 = vld [vmem:[%s3 + $0x68] sm:$0xff]
    %v914 = vld [vmem:[%s3 + $0x70] sm:$0xff]
    %v915 = vld [vmem:[%s3 + $0x78] sm:$0xff]
    %v916 = vld [vmem:[#allocation3] sm:$0xff]
    %v917 = vld [vmem:[#allocation3 + $0x8] sm:$0x3]
    %v918 = vpack.c.bf16 %v917, %v916
    %s919 = scalar_lea.vmem %s3, 128
    %v920 = vld [vmem:[%s919] sm:$0xff]
    %v921 = vld [vmem:[%s919 + $0x8] sm:$0xff]
    %v922 = vld [vmem:[%s919 + $0x10] sm:$0xff]
    %v923 = vld [vmem:[%s919 + $0x18] sm:$0xff]
    %v924 = vld [vmem:[%s919 + $0x20] sm:$0xff]
    %v925 = vld [vmem:[%s919 + $0x28] sm:$0xff]
    %v926 = vld [vmem:[%s919 + $0x30] sm:$0xff]
    %v927 = vld [vmem:[%s919 + $0x38] sm:$0xff]
    %v928 = vld [vmem:[%s919 + $0x40] sm:$0xff]
    %v929 = vld [vmem:[%s919 + $0x48] sm:$0xff]
    %v930 = vld [vmem:[%s919 + $0x50] sm:$0xff]
    %v931 = vld [vmem:[%s919 + $0x58] sm:$0xff]
    %v932 = vld [vmem:[%s919 + $0x60] sm:$0xff]
    %v933 = vld [vmem:[%s919 + $0x68] sm:$0xff]
    %v934 = vld [vmem:[%s919 + $0x70] sm:$0xff]
    %v935 = vld [vmem:[%s919 + $0x78] sm:$0xff]
    %v952 = vunpack.c.l.b16 %v920
    %v953 = vunpack.c.h.b16 %v920
    %v954 = vunpack.c.l.b16 %v921
    %v955 = vunpack.c.h.b16 %v921
    %v956 = vunpack.c.l.b16 %v922
    %v957 = vunpack.c.h.b16 %v922
    %v958 = vunpack.c.l.b16 %v923
    %v959 = vunpack.c.h.b16 %v923
    %v960 = vunpack.c.l.b16 %v924
    %v961 = vunpack.c.h.b16 %v924
    %v962 = vunpack.c.l.b16 %v925
    %v963 = vunpack.c.h.b16 %v925
    %v964 = vunpack.c.l.b16 %v926
    %v965 = vunpack.c.h.b16 %v926
    %v966 = vunpack.c.l.b16 %v927
    %v967 = vunpack.c.h.b16 %v927
    %v968 = vunpack.c.l.b16 %v928
    %v969 = vunpack.c.h.b16 %v928
    %v970 = vunpack.c.l.b16 %v929
    %v971 = vunpack.c.h.b16 %v929
    %v972 = vunpack.c.l.b16 %v930
    %v973 = vunpack.c.h.b16 %v930
    %v974 = vunpack.c.l.b16 %v931
    %v975 = vunpack.c.h.b16 %v931
    %v976 = vunpack.c.l.b16 %v932
    %v977 = vunpack.c.h.b16 %v932
    %v978 = vunpack.c.l.b16 %v933
    %v979 = vunpack.c.h.b16 %v933
    %v980 = vunpack.c.l.b16 %v934
    %v981 = vunpack.c.h.b16 %v934
    %v982 = vunpack.c.l.b16 %v935
    %v983 = vunpack.c.h.b16 %v935
    %v984 = vpack.c.b16 %v954, %v952
    %v985 = vpack.c.b16 %v955, %v953
    %v986 = vpack.c.b16 %v958, %v956
    %v987 = vpack.c.b16 %v959, %v957
    %v988 = vpack.c.b16 %v962, %v960
    %v989 = vpack.c.b16 %v963, %v961
    %v990 = vpack.c.b16 %v966, %v964
    %v991 = vpack.c.b16 %v967, %v965
    %v992 = vpack.c.b16 %v970, %v968
    %v993 = vpack.c.b16 %v971, %v969
    %v994 = vpack.c.b16 %v974, %v972
    %v995 = vpack.c.b16 %v975, %v973
    %v996 = vpack.c.b16 %v978, %v976
    %v997 = vpack.c.b16 %v979, %v977
    %v998 = vpack.c.b16 %v982, %v980
    %v999 = vpack.c.b16 %v983, %v981
    %1016 = vmatprep.subr.bf16.mxu0 %v999
    %1017 = vmatpush1.bf16.msra.mxu0 %v998
    %1018 = vmatprep.subr.bf16.mxu0 %v997
    %1019 = vmatpush1.bf16.msra.mxu0 %v996
    %1020 = vmatprep.subr.bf16.mxu0 %v995
    %1021 = vmatpush1.bf16.msra.mxu0 %v994
    %1022 = vmatprep.subr.bf16.mxu0 %v993
    %1023 = vmatpush1.bf16.msra.mxu0 %v992
    %1024 = vmatprep.subr.bf16.mxu0 %v991
    %1025 = vmatpush1.bf16.msra.mxu0 %v990
    %1026 = vmatprep.subr.bf16.mxu0 %v989
    %1027 = vmatpush1.bf16.msra.mxu0 %v988
    %1028 = vmatprep.subr.bf16.mxu0 %v987
    %1029 = vmatpush1.bf16.msra.mxu0 %v986
    %1030 = vmatprep.subr.bf16.mxu0 %v985
    %1031 = vmatpush1.bf16.msra.mxu0 %v984
    %1032 = vmatprep.subr.bf16.mxu0 0
    %1033 = vmatpush2.bf16.msra.mxu0 0
    %1034 = vmatprep.subr.bf16.mxu0 0
    %1035 = vmatpush2.bf16.msra.mxu0 0
    %1036 = vmatprep.subr.bf16.mxu0 0
    %1037 = vmatpush2.bf16.msra.mxu0 0
    %1038 = vmatprep.subr.bf16.mxu0 0
    %1039 = vmatpush2.bf16.msra.mxu0 0
    %1040 = vmatprep.subr.bf16.mxu0 0
    %1041 = vmatpush2.bf16.msra.mxu0 0
    %1042 = vmatprep.subr.bf16.mxu0 0
    %1043 = vmatpush2.bf16.msra.mxu0 0
    %1044 = vmatprep.subr.bf16.mxu0 0
    %1045 = vmatpush2.bf16.msra.mxu0 0
    %1046 = vmatprep.subr.bf16.mxu0 0
    %1047 = vmatpush2.bf16.msra.mxu0 0
    %1048 = vmatprep.mubr.bf16.mxu0 0
    %1049 = vmatmul.mubr.bf16.gmra.mxu0 %v918
    %v1050 = vpop.f32.mrf.mxu0
    %v1051 = vadd.f32 0.0, %v1050
    %v1052 = vpop.f32.mrf.mxu0
    %v1053 = vadd.f32 0.0, %v1052
    %v1054 = vpop.f32.mrf.mxu0
    %v1055 = vadd.f32 0.0, %v1054
    %v1056 = vpop.f32.mrf.mxu0
    %v1057 = vadd.f32 0.0, %v1056
    %1058 = vdwg.mxu0
    %v1075 = vunpack.c.l.b16 %v900
    %v1076 = vunpack.c.h.b16 %v900
    %v1077 = vunpack.c.l.b16 %v901
    %v1078 = vunpack.c.h.b16 %v901
    %v1079 = vunpack.c.l.b16 %v902
    %v1080 = vunpack.c.h.b16 %v902
    %v1081 = vunpack.c.l.b16 %v903
    %v1082 = vunpack.c.h.b16 %v903
    %v1083 = vunpack.c.l.b16 %v904
    %v1084 = vunpack.c.h.b16 %v904
    %v1085 = vunpack.c.l.b16 %v905
    %v1086 = vunpack.c.h.b16 %v905
    %v1087 = vunpack.c.l.b16 %v906
    %v1088 = vunpack.c.h.b16 %v906
    %v1089 = vunpack.c.l.b16 %v907
    %v1090 = vunpack.c.h.b16 %v907
    %v1091 = vunpack.c.l.b16 %v908
    %v1092 = vunpack.c.h.b16 %v908
    %v1093 = vunpack.c.l.b16 %v909
    %v1094 = vunpack.c.h.b16 %v909
    %v1095 = vunpack.c.l.b16 %v910
    %v1096 = vunpack.c.h.b16 %v910
    %v1097 = vunpack.c.l.b16 %v911
    %v1098 = vunpack.c.h.b16 %v911
    %v1099 = vunpack.c.l.b16 %v912
    %v1100 = vunpack.c.h.b16 %v912
    %v1101 = vunpack.c.l.b16 %v913
    %v1102 = vunpack.c.h.b16 %v913
    %v1103 = vunpack.c.l.b16 %v914
    %v1104 = vunpack.c.h.b16 %v914
    %v1105 = vunpack.c.l.b16 %v915
    %v1106 = vunpack.c.h.b16 %v915
    %v1107 = vpack.c.b16 %v1077, %v1075
    %v1108 = vpack.c.b16 %v1078, %v1076
    %v1109 = vpack.c.b16 %v1081, %v1079
    %v1110 = vpack.c.b16 %v1082, %v1080
    %v1111 = vpack.c.b16 %v1085, %v1083
    %v1112 = vpack.c.b16 %v1086, %v1084
    %v1113 = vpack.c.b16 %v1089, %v1087
    %v1114 = vpack.c.b16 %v1090, %v1088
    %v1115 = vpack.c.b16 %v1093, %v1091
    %v1116 = vpack.c.b16 %v1094, %v1092
    %v1117 = vpack.c.b16 %v1097, %v1095
    %v1118 = vpack.c.b16 %v1098, %v1096
    %v1119 = vpack.c.b16 %v1101, %v1099
    %v1120 = vpack.c.b16 %v1102, %v1100
    %v1121 = vpack.c.b16 %v1105, %v1103
    %v1122 = vpack.c.b16 %v1106, %v1104
    %1139 = vmatprep.subr.bf16.mxu0 %v1122
    %1140 = vmatpush1.bf16.msra.mxu0 %v1121
    %1141 = vmatprep.subr.bf16.mxu0 %v1120
    %1142 = vmatpush1.bf16.msra.mxu0 %v1119
    %1143 = vmatprep.subr.bf16.mxu0 %v1118
    %1144 = vmatpush1.bf16.msra.mxu0 %v1117
    %1145 = vmatprep.subr.bf16.mxu0 %v1116
    %1146 = vmatpush1.bf16.msra.mxu0 %v1115
    %1147 = vmatprep.subr.bf16.mxu0 %v1114
    %1148 = vmatpush1.bf16.msra.mxu0 %v1113
    %1149 = vmatprep.subr.bf16.mxu0 %v1112
    %1150 = vmatpush1.bf16.msra.mxu0 %v1111
    %1151 = vmatprep.subr.bf16.mxu0 %v1110
    %1152 = vmatpush1.bf16.msra.mxu0 %v1109
    %1153 = vmatprep.subr.bf16.mxu0 %v1108
    %1154 = vmatpush1.bf16.msra.mxu0 %v1107
    %1155 = vmatprep.subr.bf16.mxu0 0
    %1156 = vmatpush2.bf16.msra.mxu0 0
    %1157 = vmatprep.subr.bf16.mxu0 0
    %1158 = vmatpush2.bf16.msra.mxu0 0
    %1159 = vmatprep.subr.bf16.mxu0 0
    %1160 = vmatpush2.bf16.msra.mxu0 0
    %1161 = vmatprep.subr.bf16.mxu0 0
    %1162 = vmatpush2.bf16.msra.mxu0 0
    %1163 = vmatprep.subr.bf16.mxu0 0
    %1164 = vmatpush2.bf16.msra.mxu0 0
    %1165 = vmatprep.subr.bf16.mxu0 0
    %1166 = vmatpush2.bf16.msra.mxu0 0
    %1167 = vmatprep.subr.bf16.mxu0 0
    %1168 = vmatpush2.bf16.msra.mxu0 0
    %1169 = vmatprep.subr.bf16.mxu0 0
    %1170 = vmatpush2.bf16.msra.mxu0 0
    %1171 = vmatprep.mubr.bf16.mxu0 0
    %1172 = vmatmul.mubr.bf16.gmra.mxu0 %v899
    %v1173 = vpop.f32.mrf.mxu0
    %v1174 = vadd.f32 %v1051, %v1173
    %v1175 = vpop.f32.mrf.mxu0
    %v1176 = vadd.f32 %v1053, %v1175
    %v1177 = vpop.f32.mrf.mxu0
    %v1178 = vadd.f32 %v1055, %v1177
    %v1179 = vpop.f32.mrf.mxu0
    %v1180 = vadd.f32 %v1057, %v1179
    %1181 = vdwg.mxu0
    %v1182 = vld [vmem:[#allocation2 + $0x2] sm:$0xff]
    %v1183 = vld [vmem:[#allocation2 + $0xa] sm:$0x3]
    %v1184 = vpack.c.bf16 %v1183, %v1182
    %s1185 = scalar_lea.vmem %s3, 256
    %v1186 = vld [vmem:[%s1185] sm:$0xff]
    %v1187 = vld [vmem:[%s1185 + $0x8] sm:$0xff]
    %v1188 = vld [vmem:[%s1185 + $0x10] sm:$0xff]
    %v1189 = vld [vmem:[%s1185 + $0x18] sm:$0xff]
    %v1190 = vld [vmem:[%s1185 + $0x20] sm:$0xff]
    %v1191 = vld [vmem:[%s1185 + $0x28] sm:$0xff]
    %v1192 = vld [vmem:[%s1185 + $0x30] sm:$0xff]
    %v1193 = vld [vmem:[%s1185 + $0x38] sm:$0xff]
    %v1194 = vld [vmem:[%s1185 + $0x40] sm:$0xff]
    %v1195 = vld [vmem:[%s1185 + $0x48] sm:$0xff]
    %v1196 = vld [vmem:[%s1185 + $0x50] sm:$0xff]
    %v1197 = vld [vmem:[%s1185 + $0x58] sm:$0xff]
    %v1198 = vld [vmem:[%s1185 + $0x60] sm:$0xff]
    %v1199 = vld [vmem:[%s1185 + $0x68] sm:$0xff]
    %v1200 = vld [vmem:[%s1185 + $0x70] sm:$0xff]
    %v1201 = vld [vmem:[%s1185 + $0x78] sm:$0xff]
    %v1218 = vunpack.c.l.b16 %v1186
    %v1219 = vunpack.c.h.b16 %v1186
    %v1220 = vunpack.c.l.b16 %v1187
    %v1221 = vunpack.c.h.b16 %v1187
    %v1222 = vunpack.c.l.b16 %v1188
    %v1223 = vunpack.c.h.b16 %v1188
    %v1224 = vunpack.c.l.b16 %v1189
    %v1225 = vunpack.c.h.b16 %v1189
    %v1226 = vunpack.c.l.b16 %v1190
    %v1227 = vunpack.c.h.b16 %v1190
    %v1228 = vunpack.c.l.b16 %v1191
    %v1229 = vunpack.c.h.b16 %v1191
    %v1230 = vunpack.c.l.b16 %v1192
    %v1231 = vunpack.c.h.b16 %v1192
    %v1232 = vunpack.c.l.b16 %v1193
    %v1233 = vunpack.c.h.b16 %v1193
    %v1234 = vunpack.c.l.b16 %v1194
    %v1235 = vunpack.c.h.b16 %v1194
    %v1236 = vunpack.c.l.b16 %v1195
    %v1237 = vunpack.c.h.b16 %v1195
    %v1238 = vunpack.c.l.b16 %v1196
    %v1239 = vunpack.c.h.b16 %v1196
    %v1240 = vunpack.c.l.b16 %v1197
    %v1241 = vunpack.c.h.b16 %v1197
    %v1242 = vunpack.c.l.b16 %v1198
    %v1243 = vunpack.c.h.b16 %v1198
    %v1244 = vunpack.c.l.b16 %v1199
    %v1245 = vunpack.c.h.b16 %v1199
    %v1246 = vunpack.c.l.b16 %v1200
    %v1247 = vunpack.c.h.b16 %v1200
    %v1248 = vunpack.c.l.b16 %v1201
    %v1249 = vunpack.c.h.b16 %v1201
    %v1250 = vpack.c.b16 %v1220, %v1218
    %v1251 = vpack.c.b16 %v1221, %v1219
    %v1252 = vpack.c.b16 %v1224, %v1222
    %v1253 = vpack.c.b16 %v1225, %v1223
    %v1254 = vpack.c.b16 %v1228, %v1226
    %v1255 = vpack.c.b16 %v1229, %v1227
    %v1256 = vpack.c.b16 %v1232, %v1230
    %v1257 = vpack.c.b16 %v1233, %v1231
    %v1258 = vpack.c.b16 %v1236, %v1234
    %v1259 = vpack.c.b16 %v1237, %v1235
    %v1260 = vpack.c.b16 %v1240, %v1238
    %v1261 = vpack.c.b16 %v1241, %v1239
    %v1262 = vpack.c.b16 %v1244, %v1242
    %v1263 = vpack.c.b16 %v1245, %v1243
    %v1264 = vpack.c.b16 %v1248, %v1246
    %v1265 = vpack.c.b16 %v1249, %v1247
    %1282 = vmatprep.subr.bf16.mxu0 %v1265
    %1283 = vmatpush1.bf16.msra.mxu0 %v1264
    %1284 = vmatprep.subr.bf16.mxu0 %v1263
    %1285 = vmatpush1.bf16.msra.mxu0 %v1262
    %1286 = vmatprep.subr.bf16.mxu0 %v1261
    %1287 = vmatpush1.bf16.msra.mxu0 %v1260
    %1288 = vmatprep.subr.bf16.mxu0 %v1259
    %1289 = vmatpush1.bf16.msra.mxu0 %v1258
    %1290 = vmatprep.subr.bf16.mxu0 %v1257
    %1291 = vmatpush1.bf16.msra.mxu0 %v1256
    %1292 = vmatprep.subr.bf16.mxu0 %v1255
    %1293 = vmatpush1.bf16.msra.mxu0 %v1254
    %1294 = vmatprep.subr.bf16.mxu0 %v1253
    %1295 = vmatpush1.bf16.msra.mxu0 %v1252
    %1296 = vmatprep.subr.bf16.mxu0 %v1251
    %1297 = vmatpush1.bf16.msra.mxu0 %v1250
    %1298 = vmatprep.subr.bf16.mxu0 0
    %1299 = vmatpush2.bf16.msra.mxu0 0
    %1300 = vmatprep.subr.bf16.mxu0 0
    %1301 = vmatpush2.bf16.msra.mxu0 0
    %1302 = vmatprep.subr.bf16.mxu0 0
    %1303 = vmatpush2.bf16.msra.mxu0 0
    %1304 = vmatprep.subr.bf16.mxu0 0
    %1305 = vmatpush2.bf16.msra.mxu0 0
    %1306 = vmatprep.subr.bf16.mxu0 0
    %1307 = vmatpush2.bf16.msra.mxu0 0
    %1308 = vmatprep.subr.bf16.mxu0 0
    %1309 = vmatpush2.bf16.msra.mxu0 0
    %1310 = vmatprep.subr.bf16.mxu0 0
    %1311 = vmatpush2.bf16.msra.mxu0 0
    %1312 = vmatprep.subr.bf16.mxu0 0
    %1313 = vmatpush2.bf16.msra.mxu0 0
    %1314 = vmatprep.mubr.bf16.mxu0 0
    %1315 = vmatmul.mubr.bf16.gmra.mxu0 %v1184
    %v1316 = vpop.f32.mrf.mxu0
    %v1317 = vadd.f32 0.0, %v1316
    %v1318 = vpop.f32.mrf.mxu0
    %v1319 = vadd.f32 0.0, %v1318
    %v1320 = vpop.f32.mrf.mxu0
    %v1321 = vadd.f32 0.0, %v1320
    %v1322 = vpop.f32.mrf.mxu0
    %v1323 = vadd.f32 0.0, %v1322
    %1324 = vdwg.mxu0
    %v1325 = vadd.f32 %v1174, %v1317
    %v1326 = vadd.f32 %v1176, %v1319
    %v1327 = vadd.f32 %v1178, %v1321
    %v1328 = vadd.f32 %v1180, %v1323
    %v1329 = vld [vmem:[#allocation3 + $0x2] sm:$0xff]
    %v1330 = vld [vmem:[#allocation3 + $0xa] sm:$0x3]
    %v1331 = vpack.c.bf16 %v1330, %v1329
    %s1332 = scalar_lea.vmem %s3, 384
    %v1333 = vld [vmem:[%s1332] sm:$0xff]
    %v1334 = vld [vmem:[%s1332 + $0x8] sm:$0xff]
    %v1335 = vld [vmem:[%s1332 + $0x10] sm:$0xff]
    %v1336 = vld [vmem:[%s1332 + $0x18] sm:$0xff]
    %v1337 = vld [vmem:[%s1332 + $0x20] sm:$0xff]
    %v1338 = vld [vmem:[%s1332 + $0x28] sm:$0xff]
    %v1339 = vld [vmem:[%s1332 + $0x30] sm:$0xff]
    %v1340 = vld [vmem:[%s1332 + $0x38] sm:$0xff]
    %v1341 = vld [vmem:[%s1332 + $0x40] sm:$0xff]
    %v1342 = vld [vmem:[%s1332 + $0x48] sm:$0xff]
    %v1343 = vld [vmem:[%s1332 + $0x50] sm:$0xff]
    %v1344 = vld [vmem:[%s1332 + $0x58] sm:$0xff]
    %v1345 = vld [vmem:[%s1332 + $0x60] sm:$0xff]
    %v1346 = vld [vmem:[%s1332 + $0x68] sm:$0xff]
    %v1347 = vld [vmem:[%s1332 + $0x70] sm:$0xff]
    %v1348 = vld [vmem:[%s1332 + $0x78] sm:$0xff]
    %v1365 = vunpack.c.l.b16 %v1333
    %v1366 = vunpack.c.h.b16 %v1333
    %v1367 = vunpack.c.l.b16 %v1334
    %v1368 = vunpack.c.h.b16 %v1334
    %v1369 = vunpack.c.l.b16 %v1335
    %v1370 = vunpack.c.h.b16 %v1335
    %v1371 = vunpack.c.l.b16 %v1336
    %v1372 = vunpack.c.h.b16 %v1336
    %v1373 = vunpack.c.l.b16 %v1337
    %v1374 = vunpack.c.h.b16 %v1337
    %v1375 = vunpack.c.l.b16 %v1338
    %v1376 = vunpack.c.h.b16 %v1338
    %v1377 = vunpack.c.l.b16 %v1339
    %v1378 = vunpack.c.h.b16 %v1339
    %v1379 = vunpack.c.l.b16 %v1340
    %v1380 = vunpack.c.h.b16 %v1340
    %v1381 = vunpack.c.l.b16 %v1341
    %v1382 = vunpack.c.h.b16 %v1341
    %v1383 = vunpack.c.l.b16 %v1342
    %v1384 = vunpack.c.h.b16 %v1342
    %v1385 = vunpack.c.l.b16 %v1343
    %v1386 = vunpack.c.h.b16 %v1343
    %v1387 = vunpack.c.l.b16 %v1344
    %v1388 = vunpack.c.h.b16 %v1344
    %v1389 = vunpack.c.l.b16 %v1345
    %v1390 = vunpack.c.h.b16 %v1345
    %v1391 = vunpack.c.l.b16 %v1346
    %v1392 = vunpack.c.h.b16 %v1346
    %v1393 = vunpack.c.l.b16 %v1347
    %v1394 = vunpack.c.h.b16 %v1347
    %v1395 = vunpack.c.l.b16 %v1348
    %v1396 = vunpack.c.h.b16 %v1348
    %v1397 = vpack.c.b16 %v1367, %v1365
    %v1398 = vpack.c.b16 %v1368, %v1366
    %v1399 = vpack.c.b16 %v1371, %v1369
    %v1400 = vpack.c.b16 %v1372, %v1370
    %v1401 = vpack.c.b16 %v1375, %v1373
    %v1402 = vpack.c.b16 %v1376, %v1374
    %v1403 = vpack.c.b16 %v1379, %v1377
    %v1404 = vpack.c.b16 %v1380, %v1378
    %v1405 = vpack.c.b16 %v1383, %v1381
    %v1406 = vpack.c.b16 %v1384, %v1382
    %v1407 = vpack.c.b16 %v1387, %v1385
    %v1408 = vpack.c.b16 %v1388, %v1386
    %v1409 = vpack.c.b16 %v1391, %v1389
    %v1410 = vpack.c.b16 %v1392, %v1390
    %v1411 = vpack.c.b16 %v1395, %v1393
    %v1412 = vpack.c.b16 %v1396, %v1394
    %1429 = vmatprep.subr.bf16.mxu0 %v1412
    %1430 = vmatpush1.bf16.msra.mxu0 %v1411
    %1431 = vmatprep.subr.bf16.mxu0 %v1410
    %1432 = vmatpush1.bf16.msra.mxu0 %v1409
    %1433 = vmatprep.subr.bf16.mxu0 %v1408
    %1434 = vmatpush1.bf16.msra.mxu0 %v1407
    %1435 = vmatprep.subr.bf16.mxu0 %v1406
    %1436 = vmatpush1.bf16.msra.mxu0 %v1405
    %1437 = vmatprep.subr.bf16.mxu0 %v1404
    %1438 = vmatpush1.bf16.msra.mxu0 %v1403
    %1439 = vmatprep.subr.bf16.mxu0 %v1402
    %1440 = vmatpush1.bf16.msra.mxu0 %v1401
    %1441 = vmatprep.subr.bf16.mxu0 %v1400
    %1442 = vmatpush1.bf16.msra.mxu0 %v1399
    %1443 = vmatprep.subr.bf16.mxu0 %v1398
    %1444 = vmatpush1.bf16.msra.mxu0 %v1397
    %1445 = vmatprep.subr.bf16.mxu0 0
    %1446 = vmatpush2.bf16.msra.mxu0 0
    %1447 = vmatprep.subr.bf16.mxu0 0
    %1448 = vmatpush2.bf16.msra.mxu0 0
    %1449 = vmatprep.subr.bf16.mxu0 0
    %1450 = vmatpush2.bf16.msra.mxu0 0
    %1451 = vmatprep.subr.bf16.mxu0 0
    %1452 = vmatpush2.bf16.msra.mxu0 0
    %1453 = vmatprep.subr.bf16.mxu0 0
    %1454 = vmatpush2.bf16.msra.mxu0 0
    %1455 = vmatprep.subr.bf16.mxu0 0
    %1456 = vmatpush2.bf16.msra.mxu0 0
    %1457 = vmatprep.subr.bf16.mxu0 0
    %1458 = vmatpush2.bf16.msra.mxu0 0
    %1459 = vmatprep.subr.bf16.mxu0 0
    %1460 = vmatpush2.bf16.msra.mxu0 0
    %1461 = vmatprep.mubr.bf16.mxu0 0
    %1462 = vmatmul.mubr.bf16.gmra.mxu0 %v1331
    %v1463 = vpop.f32.mrf.mxu0
    %v1464 = vadd.f32 0.0, %v1463
    %v1465 = vpop.f32.mrf.mxu0
    %v1466 = vadd.f32 0.0, %v1465
    %v1467 = vpop.f32.mrf.mxu0
    %v1468 = vadd.f32 0.0, %v1467
    %v1469 = vpop.f32.mrf.mxu0
    %v1470 = vadd.f32 0.0, %v1469
    %1471 = vdwg.mxu0
    %v1472 = vadd.f32 %v1325, %v1464
    %v1473 = vadd.f32 %v1326, %v1466
    %v1474 = vadd.f32 %v1327, %v1468
    %v1475 = vadd.f32 %v1328, %v1470
    %v1476 = vld [vmem:[#allocation2 + $0x4] sm:$0xff]
    %v1477 = vld [vmem:[#allocation2 + $0xc] sm:$0x3]
    %v1478 = vpack.c.bf16 %v1477, %v1476
    %s1479 = scalar_lea.vmem %s3, 512
    %v1480 = vld [vmem:[%s1479] sm:$0xff]
    %v1481 = vld [vmem:[%s1479 + $0x8] sm:$0xff]
    %v1482 = vld [vmem:[%s1479 + $0x10] sm:$0xff]
    %v1483 = vld [vmem:[%s1479 + $0x18] sm:$0xff]
    %v1484 = vld [vmem:[%s1479 + $0x20] sm:$0xff]
    %v1485 = vld [vmem:[%s1479 + $0x28] sm:$0xff]
    %v1486 = vld [vmem:[%s1479 + $0x30] sm:$0xff]
    %v1487 = vld [vmem:[%s1479 + $0x38] sm:$0xff]
    %v1488 = vld [vmem:[%s1479 + $0x40] sm:$0xff]
    %v1489 = vld [vmem:[%s1479 + $0x48] sm:$0xff]
    %v1490 = vld [vmem:[%s1479 + $0x50] sm:$0xff]
    %v1491 = vld [vmem:[%s1479 + $0x58] sm:$0xff]
    %v1492 = vld [vmem:[%s1479 + $0x60] sm:$0xff]
    %v1493 = vld [vmem:[%s1479 + $0x68] sm:$0xff]
    %v1494 = vld [vmem:[%s1479 + $0x70] sm:$0xff]
    %v1495 = vld [vmem:[%s1479 + $0x78] sm:$0xff]
    %v1512 = vunpack.c.l.b16 %v1480
    %v1513 = vunpack.c.h.b16 %v1480
    %v1514 = vunpack.c.l.b16 %v1481
    %v1515 = vunpack.c.h.b16 %v1481
    %v1516 = vunpack.c.l.b16 %v1482
    %v1517 = vunpack.c.h.b16 %v1482
    %v1518 = vunpack.c.l.b16 %v1483
    %v1519 = vunpack.c.h.b16 %v1483
    %v1520 = vunpack.c.l.b16 %v1484
    %v1521 = vunpack.c.h.b16 %v1484
    %v1522 = vunpack.c.l.b16 %v1485
    %v1523 = vunpack.c.h.b16 %v1485
    %v1524 = vunpack.c.l.b16 %v1486
    %v1525 = vunpack.c.h.b16 %v1486
    %v1526 = vunpack.c.l.b16 %v1487
    %v1527 = vunpack.c.h.b16 %v1487
    %v1528 = vunpack.c.l.b16 %v1488
    %v1529 = vunpack.c.h.b16 %v1488
    %v1530 = vunpack.c.l.b16 %v1489
    %v1531 = vunpack.c.h.b16 %v1489
    %v1532 = vunpack.c.l.b16 %v1490
    %v1533 = vunpack.c.h.b16 %v1490
    %v1534 = vunpack.c.l.b16 %v1491
    %v1535 = vunpack.c.h.b16 %v1491
    %v1536 = vunpack.c.l.b16 %v1492
    %v1537 = vunpack.c.h.b16 %v1492
    %v1538 = vunpack.c.l.b16 %v1493
    %v1539 = vunpack.c.h.b16 %v1493
    %v1540 = vunpack.c.l.b16 %v1494
    %v1541 = vunpack.c.h.b16 %v1494
    %v1542 = vunpack.c.l.b16 %v1495
    %v1543 = vunpack.c.h.b16 %v1495
    %v1544 = vpack.c.b16 %v1514, %v1512
    %v1545 = vpack.c.b16 %v1515, %v1513
    %v1546 = vpack.c.b16 %v1518, %v1516
    %v1547 = vpack.c.b16 %v1519, %v1517
    %v1548 = vpack.c.b16 %v1522, %v1520
    %v1549 = vpack.c.b16 %v1523, %v1521
    %v1550 = vpack.c.b16 %v1526, %v1524
    %v1551 = vpack.c.b16 %v1527, %v1525
    %v1552 = vpack.c.b16 %v1530, %v1528
    %v1553 = vpack.c.b16 %v1531, %v1529
    %v1554 = vpack.c.b16 %v1534, %v1532
    %v1555 = vpack.c.b16 %v1535, %v1533
    %v1556 = vpack.c.b16 %v1538, %v1536
    %v1557 = vpack.c.b16 %v1539, %v1537
    %v1558 = vpack.c.b16 %v1542, %v1540
    %v1559 = vpack.c.b16 %v1543, %v1541
    %1576 = vmatprep.subr.bf16.mxu0 %v1559
    %1577 = vmatpush1.bf16.msra.mxu0 %v1558
    %1578 = vmatprep.subr.bf16.mxu0 %v1557
    %1579 = vmatpush1.bf16.msra.mxu0 %v1556
    %1580 = vmatprep.subr.bf16.mxu0 %v1555
    %1581 = vmatpush1.bf16.msra.mxu0 %v1554
    %1582 = vmatprep.subr.bf16.mxu0 %v1553
    %1583 = vmatpush1.bf16.msra.mxu0 %v1552
    %1584 = vmatprep.subr.bf16.mxu0 %v1551
    %1585 = vmatpush1.bf16.msra.mxu0 %v1550
    %1586 = vmatprep.subr.bf16.mxu0 %v1549
    %1587 = vmatpush1.bf16.msra.mxu0 %v1548
    %1588 = vmatprep.subr.bf16.mxu0 %v1547
    %1589 = vmatpush1.bf16.msra.mxu0 %v1546
    %1590 = vmatprep.subr.bf16.mxu0 %v1545
    %1591 = vmatpush1.bf16.msra.mxu0 %v1544
    %1592 = vmatprep.subr.bf16.mxu0 0
    %1593 = vmatpush2.bf16.msra.mxu0 0
    %1594 = vmatprep.subr.bf16.mxu0 0
    %1595 = vmatpush2.bf16.msra.mxu0 0
    %1596 = vmatprep.subr.bf16.mxu0 0
    %1597 = vmatpush2.bf16.msra.mxu0 0
    %1598 = vmatprep.subr.bf16.mxu0 0
    %1599 = vmatpush2.bf16.msra.mxu0 0
    %1600 = vmatprep.subr.bf16.mxu0 0
    %1601 = vmatpush2.bf16.msra.mxu0 0
    %1602 = vmatprep.subr.bf16.mxu0 0
    %1603 = vmatpush2.bf16.msra.mxu0 0
    %1604 = vmatprep.subr.bf16.mxu0 0
    %1605 = vmatpush2.bf16.msra.mxu0 0
    %1606 = vmatprep.subr.bf16.mxu0 0
    %1607 = vmatpush2.bf16.msra.mxu0 0
    %1608 = vmatprep.mubr.bf16.mxu0 0
    %1609 = vmatmul.mubr.bf16.gmra.mxu0 %v1478
    %v1610 = vpop.f32.mrf.mxu0
    %v1611 = vadd.f32 0.0, %v1610
    %v1612 = vpop.f32.mrf.mxu0
    %v1613 = vadd.f32 0.0, %v1612
    %v1614 = vpop.f32.mrf.mxu0
    %v1615 = vadd.f32 0.0, %v1614
    %v1616 = vpop.f32.mrf.mxu0
    %v1617 = vadd.f32 0.0, %v1616
    %1618 = vdwg.mxu0
    %v1619 = vadd.f32 %v1472, %v1611
    %v1620 = vadd.f32 %v1473, %v1613
    %v1621 = vadd.f32 %v1474, %v1615
    %v1622 = vadd.f32 %v1475, %v1617
    %v1624 = vlaneseq
    %v1625 = vshrl.u32 %v1624, 7
    %v1626 = vsub.s32 0, %v1625
    %v1627 = vrot.slane %v896, %v1626
    %v1628 = vlaneseq
    %v1629 = vshrl.u32 %v1628, 7
    %v1630 = vsub.s32 1, %v1629
    %v1631 = vrot.slane %v896, %v1630
    %v1634 = vadd.f32 %v1619, %v1627
    %v1635 = vadd.f32 %v1620, %v1631
    %v1636 = vadd.f32 %v1621, %v1627
    %v1637 = vadd.f32 %v1622, %v1631
    %v1638 = vmax.f32 %v1634, 0.0
    %v1639 = vmax.f32 %v1635, 0.0
    %v1640 = vmax.f32 %v1636, 0.0
    %v1641 = vmax.f32 %v1637, 0.0
    %1642 = vmatprep.subr.bf16.mxu0 %v999
    %1643 = vmatpush1.bf16.msra.mxu0 %v998
    %1644 = vmatprep.subr.bf16.mxu0 %v997
    %1645 = vmatpush1.bf16.msra.mxu0 %v996
    %1646 = vmatprep.subr.bf16.mxu0 %v995
    %1647 = vmatpush1.bf16.msra.mxu0 %v994
    %1648 = vmatprep.subr.bf16.mxu0 %v993
    %1649 = vmatpush1.bf16.msra.mxu0 %v992
    %1650 = vmatprep.subr.bf16.mxu0 %v991
    %1651 = vmatpush1.bf16.msra.mxu0 %v990
    %1652 = vmatprep.subr.bf16.mxu0 %v989
    %1653 = vmatpush1.bf16.msra.mxu0 %v988
    %1654 = vmatprep.subr.bf16.mxu0 %v987
    %1655 = vmatpush1.bf16.msra.mxu0 %v986
    %1656 = vmatprep.subr.bf16.mxu0 %v985
    %1657 = vmatpush1.bf16.msra.mxu0 %v984
    %1658 = vmatprep.subr.bf16.mxu0 0
    %1659 = vmatpush2.bf16.msra.mxu0 0
    %1660 = vmatprep.subr.bf16.mxu0 0
    %1661 = vmatpush2.bf16.msra.mxu0 0
    %1662 = vmatprep.subr.bf16.mxu0 0
    %1663 = vmatpush2.bf16.msra.mxu0 0
    %1664 = vmatprep.subr.bf16.mxu0 0
    %1665 = vmatpush2.bf16.msra.mxu0 0
    %1666 = vmatprep.subr.bf16.mxu0 0
    %1667 = vmatpush2.bf16.msra.mxu0 0
    %1668 = vmatprep.subr.bf16.mxu0 0
    %1669 = vmatpush2.bf16.msra.mxu0 0
    %1670 = vmatprep.subr.bf16.mxu0 0
    %1671 = vmatpush2.bf16.msra.mxu0 0
    %1672 = vmatprep.subr.bf16.mxu0 0
    %1673 = vmatpush2.bf16.msra.mxu0 0
    %1674 = vmatprep.mubr.bf16.mxu0 0
    %1675 = vmatmul.mubr.bf16.gmra.mxu0 %v1184
    %v1676 = vpop.f32.mrf.mxu0
    %v1677 = vadd.f32 0.0, %v1676
    %v1678 = vpop.f32.mrf.mxu0
    %v1679 = vadd.f32 0.0, %v1678
    %v1680 = vpop.f32.mrf.mxu0
    %v1681 = vadd.f32 0.0, %v1680
    %v1682 = vpop.f32.mrf.mxu0
    %v1683 = vadd.f32 0.0, %v1682
    %1684 = vdwg.mxu0
    %1685 = vmatprep.subr.bf16.mxu0 %v1122
    %1686 = vmatpush1.bf16.msra.mxu0 %v1121
    %1687 = vmatprep.subr.bf16.mxu0 %v1120
    %1688 = vmatpush1.bf16.msra.mxu0 %v1119
    %1689 = vmatprep.subr.bf16.mxu0 %v1118
    %1690 = vmatpush1.bf16.msra.mxu0 %v1117
    %1691 = vmatprep.subr.bf16.mxu0 %v1116
    %1692 = vmatpush1.bf16.msra.mxu0 %v1115
    %1693 = vmatprep.subr.bf16.mxu0 %v1114
    %1694 = vmatpush1.bf16.msra.mxu0 %v1113
    %1695 = vmatprep.subr.bf16.mxu0 %v1112
    %1696 = vmatpush1.bf16.msra.mxu0 %v1111
    %1697 = vmatprep.subr.bf16.mxu0 %v1110
    %1698 = vmatpush1.bf16.msra.mxu0 %v1109
    %1699 = vmatprep.subr.bf16.mxu0 %v1108
    %1700 = vmatpush1.bf16.msra.mxu0 %v1107
    %1701 = vmatprep.subr.bf16.mxu0 0
    %1702 = vmatpush2.bf16.msra.mxu0 0
    %1703 = vmatprep.subr.bf16.mxu0 0
    %1704 = vmatpush2.bf16.msra.mxu0 0
    %1705 = vmatprep.subr.bf16.mxu0 0
    %1706 = vmatpush2.bf16.msra.mxu0 0
    %1707 = vmatprep.subr.bf16.mxu0 0
    %1708 = vmatpush2.bf16.msra.mxu0 0
    %1709 = vmatprep.subr.bf16.mxu0 0
    %1710 = vmatpush2.bf16.msra.mxu0 0
    %1711 = vmatprep.subr.bf16.mxu0 0
    %1712 = vmatpush2.bf16.msra.mxu0 0
    %1713 = vmatprep.subr.bf16.mxu0 0
    %1714 = vmatpush2.bf16.msra.mxu0 0
    %1715 = vmatprep.subr.bf16.mxu0 0
    %1716 = vmatpush2.bf16.msra.mxu0 0
    %1717 = vmatprep.mubr.bf16.mxu0 0
    %1718 = vmatmul.mubr.bf16.gmra.mxu0 %v918
    %v1719 = vpop.f32.mrf.mxu0
    %v1720 = vadd.f32 %v1677, %v1719
    %v1721 = vpop.f32.mrf.mxu0
    %v1722 = vadd.f32 %v1679, %v1721
    %v1723 = vpop.f32.mrf.mxu0
    %v1724 = vadd.f32 %v1681, %v1723
    %v1725 = vpop.f32.mrf.mxu0
    %v1726 = vadd.f32 %v1683, %v1725
    %1727 = vdwg.mxu0
    %1728 = vmatprep.subr.bf16.mxu0 %v1265
    %1729 = vmatpush1.bf16.msra.mxu0 %v1264
    %1730 = vmatprep.subr.bf16.mxu0 %v1263
    %1731 = vmatpush1.bf16.msra.mxu0 %v1262
    %1732 = vmatprep.subr.bf16.mxu0 %v1261
    %1733 = vmatpush1.bf16.msra.mxu0 %v1260
    %1734 = vmatprep.subr.bf16.mxu0 %v1259
    %1735 = vmatpush1.bf16.msra.mxu0 %v1258
    %1736 = vmatprep.subr.bf16.mxu0 %v1257
    %1737 = vmatpush1.bf16.msra.mxu0 %v1256
    %1738 = vmatprep.subr.bf16.mxu0 %v1255
    %1739 = vmatpush1.bf16.msra.mxu0 %v1254
    %1740 = vmatprep.subr.bf16.mxu0 %v1253
    %1741 = vmatpush1.bf16.msra.mxu0 %v1252
    %1742 = vmatprep.subr.bf16.mxu0 %v1251
    %1743 = vmatpush1.bf16.msra.mxu0 %v1250
    %1744 = vmatprep.subr.bf16.mxu0 0
    %1745 = vmatpush2.bf16.msra.mxu0 0
    %1746 = vmatprep.subr.bf16.mxu0 0
    %1747 = vmatpush2.bf16.msra.mxu0 0
    %1748 = vmatprep.subr.bf16.mxu0 0
    %1749 = vmatpush2.bf16.msra.mxu0 0
    %1750 = vmatprep.subr.bf16.mxu0 0
    %1751 = vmatpush2.bf16.msra.mxu0 0
    %1752 = vmatprep.subr.bf16.mxu0 0
    %1753 = vmatpush2.bf16.msra.mxu0 0
    %1754 = vmatprep.subr.bf16.mxu0 0
    %1755 = vmatpush2.bf16.msra.mxu0 0
    %1756 = vmatprep.subr.bf16.mxu0 0
    %1757 = vmatpush2.bf16.msra.mxu0 0
    %1758 = vmatprep.subr.bf16.mxu0 0
    %1759 = vmatpush2.bf16.msra.mxu0 0
    %1760 = vmatprep.mubr.bf16.mxu0 0
    %1761 = vmatmul.mubr.bf16.gmra.mxu0 %v1331
    %v1762 = vpop.f32.mrf.mxu0
    %v1763 = vadd.f32 0.0, %v1762
    %v1764 = vpop.f32.mrf.mxu0
    %v1765 = vadd.f32 0.0, %v1764
    %v1766 = vpop.f32.mrf.mxu0
    %v1767 = vadd.f32 0.0, %v1766
    %v1768 = vpop.f32.mrf.mxu0
    %v1769 = vadd.f32 0.0, %v1768
    %1770 = vdwg.mxu0
    %v1771 = vadd.f32 %v1720, %v1763
    %v1772 = vadd.f32 %v1722, %v1765
    %v1773 = vadd.f32 %v1724, %v1767
    %v1774 = vadd.f32 %v1726, %v1769
    %1775 = vmatprep.subr.bf16.mxu0 %v1412
    %1776 = vmatpush1.bf16.msra.mxu0 %v1411
    %1777 = vmatprep.subr.bf16.mxu0 %v1410
    %1778 = vmatpush1.bf16.msra.mxu0 %v1409
    %1779 = vmatprep.subr.bf16.mxu0 %v1408
    %1780 = vmatpush1.bf16.msra.mxu0 %v1407
    %1781 = vmatprep.subr.bf16.mxu0 %v1406
    %1782 = vmatpush1.bf16.msra.mxu0 %v1405
    %1783 = vmatprep.subr.bf16.mxu0 %v1404
    %1784 = vmatpush1.bf16.msra.mxu0 %v1403
    %1785 = vmatprep.subr.bf16.mxu0 %v1402
    %1786 = vmatpush1.bf16.msra.mxu0 %v1401
    %1787 = vmatprep.subr.bf16.mxu0 %v1400
    %1788 = vmatpush1.bf16.msra.mxu0 %v1399
    %1789 = vmatprep.subr.bf16.mxu0 %v1398
    %1790 = vmatpush1.bf16.msra.mxu0 %v1397
    %1791 = vmatprep.subr.bf16.mxu0 0
    %1792 = vmatpush2.bf16.msra.mxu0 0
    %1793 = vmatprep.subr.bf16.mxu0 0
    %1794 = vmatpush2.bf16.msra.mxu0 0
    %1795 = vmatprep.subr.bf16.mxu0 0
    %1796 = vmatpush2.bf16.msra.mxu0 0
    %1797 = vmatprep.subr.bf16.mxu0 0
    %1798 = vmatpush2.bf16.msra.mxu0 0
    %1799 = vmatprep.subr.bf16.mxu0 0
    %1800 = vmatpush2.bf16.msra.mxu0 0
    %1801 = vmatprep.subr.bf16.mxu0 0
    %1802 = vmatpush2.bf16.msra.mxu0 0
    %1803 = vmatprep.subr.bf16.mxu0 0
    %1804 = vmatpush2.bf16.msra.mxu0 0
    %1805 = vmatprep.subr.bf16.mxu0 0
    %1806 = vmatpush2.bf16.msra.mxu0 0
    %1807 = vmatprep.mubr.bf16.mxu0 0
    %1808 = vmatmul.mubr.bf16.gmra.mxu0 %v1478
    %v1809 = vpop.f32.mrf.mxu0
    %v1810 = vadd.f32 0.0, %v1809
    %v1811 = vpop.f32.mrf.mxu0
    %v1812 = vadd.f32 0.0, %v1811
    %v1813 = vpop.f32.mrf.mxu0
    %v1814 = vadd.f32 0.0, %v1813
    %v1815 = vpop.f32.mrf.mxu0
    %v1816 = vadd.f32 0.0, %v1815
    %1817 = vdwg.mxu0
    %v1818 = vadd.f32 %v1771, %v1810
    %v1819 = vadd.f32 %v1772, %v1812
    %v1820 = vadd.f32 %v1773, %v1814
    %v1821 = vadd.f32 %v1774, %v1816
    %v1822 = vld [vmem:[#allocation3 + $0x4] sm:$0xff]
    %v1823 = vld [vmem:[#allocation3 + $0xc] sm:$0x3]
    %v1824 = vpack.c.bf16 %v1823, %v1822
    %1825 = vmatprep.subr.bf16.mxu0 %v1559
    %1826 = vmatpush1.bf16.msra.mxu0 %v1558
    %1827 = vmatprep.subr.bf16.mxu0 %v1557
    %1828 = vmatpush1.bf16.msra.mxu0 %v1556
    %1829 = vmatprep.subr.bf16.mxu0 %v1555
    %1830 = vmatpush1.bf16.msra.mxu0 %v1554
    %1831 = vmatprep.subr.bf16.mxu0 %v1553
    %1832 = vmatpush1.bf16.msra.mxu0 %v1552
    %1833 = vmatprep.subr.bf16.mxu0 %v1551
    %1834 = vmatpush1.bf16.msra.mxu0 %v1550
    %1835 = vmatprep.subr.bf16.mxu0 %v1549
    %1836 = vmatpush1.bf16.msra.mxu0 %v1548
    %1837 = vmatprep.subr.bf16.mxu0 %v1547
    %1838 = vmatpush1.bf16.msra.mxu0 %v1546
    %1839 = vmatprep.subr.bf16.mxu0 %v1545
    %1840 = vmatpush1.bf16.msra.mxu0 %v1544
    %1841 = vmatprep.subr.bf16.mxu0 0
    %1842 = vmatpush2.bf16.msra.mxu0 0
    %1843 = vmatprep.subr.bf16.mxu0 0
    %1844 = vmatpush2.bf16.msra.mxu0 0
    %1845 = vmatprep.subr.bf16.mxu0 0
    %1846 = vmatpush2.bf16.msra.mxu0 0
    %1847 = vmatprep.subr.bf16.mxu0 0
    %1848 = vmatpush2.bf16.msra.mxu0 0
    %1849 = vmatprep.subr.bf16.mxu0 0
    %1850 = vmatpush2.bf16.msra.mxu0 0
    %1851 = vmatprep.subr.bf16.mxu0 0
    %1852 = vmatpush2.bf16.msra.mxu0 0
    %1853 = vmatprep.subr.bf16.mxu0 0
    %1854 = vmatpush2.bf16.msra.mxu0 0
    %1855 = vmatprep.subr.bf16.mxu0 0
    %1856 = vmatpush2.bf16.msra.mxu0 0
    %1857 = vmatprep.mubr.bf16.mxu0 0
    %1858 = vmatmul.mubr.bf16.gmra.mxu0 %v1824
    %v1859 = vpop.f32.mrf.mxu0
    %v1860 = vadd.f32 0.0, %v1859
    %v1861 = vpop.f32.mrf.mxu0
    %v1862 = vadd.f32 0.0, %v1861
    %v1863 = vpop.f32.mrf.mxu0
    %v1864 = vadd.f32 0.0, %v1863
    %v1865 = vpop.f32.mrf.mxu0
    %v1866 = vadd.f32 0.0, %v1865
    %1867 = vdwg.mxu0
    %v1868 = vadd.f32 %v1818, %v1860
    %v1869 = vadd.f32 %v1819, %v1862
    %v1870 = vadd.f32 %v1820, %v1864
    %v1871 = vadd.f32 %v1821, %v1866
    %v1872 = vadd.f32 %v1868, %v1627
    %v1873 = vadd.f32 %v1869, %v1631
    %v1874 = vadd.f32 %v1870, %v1627
    %v1875 = vadd.f32 %v1871, %v1631
    %v1876 = vmax.f32 %v1872, 0.0
    %v1877 = vmax.f32 %v1873, 0.0
    %v1878 = vmax.f32 %v1874, 0.0
    %v1879 = vmax.f32 %v1875, 0.0
    %v1880 = vmax.f32 %v1638, %v1876
    %v1881 = vmax.f32 %v1639, %v1877
    %v1882 = vmax.f32 %v1640, %v1878
    %v1883 = vmax.f32 %v1641, %v1879
    %v1884 = vmax.f32 %v1880, %v1881
    %v1885 = vmax.f32 %v1882, %v1883
    %v1886 = vld [vmem:[%s6] sm:$0x1]
    %v1887 = vpack.c.bf16 %v1884, %v1884
    %v1888 = vld [vmem:[%s5] sm:$0xf]
    %v1889 = vld [vmem:[%s5 + $0x4] sm:$0xf]
    %v1890 = vld [vmem:[%s5 + $0x8] sm:$0xf]
    %v1891 = vld [vmem:[%s5 + $0xc] sm:$0xf]
    %v1892 = vld [vmem:[%s5 + $0x10] sm:$0xf]
    %v1893 = vld [vmem:[%s5 + $0x14] sm:$0xf]
    %v1894 = vld [vmem:[%s5 + $0x18] sm:$0xf]
    %v1895 = vld [vmem:[%s5 + $0x1c] sm:$0xf]
    %v1896 = vld [vmem:[%s5 + $0x20] sm:$0xf]
    %v1897 = vld [vmem:[%s5 + $0x24] sm:$0xf]
    %v1898 = vld [vmem:[%s5 + $0x28] sm:$0xf]
    %v1899 = vld [vmem:[%s5 + $0x2c] sm:$0xf]
    %v1900 = vld [vmem:[%s5 + $0x30] sm:$0xf]
    %v1901 = vld [vmem:[%s5 + $0x34] sm:$0xf]
    %v1902 = vld [vmem:[%s5 + $0x38] sm:$0xf]
    %v1903 = vld [vmem:[%s5 + $0x3c] sm:$0xf]
    %v1920 = vunpack.c.l.b16 %v1888
    %v1921 = vunpack.c.l.b16 %v1889
    %v1922 = vunpack.c.l.b16 %v1890
    %v1923 = vunpack.c.l.b16 %v1891
    %v1924 = vunpack.c.l.b16 %v1892
    %v1925 = vunpack.c.l.b16 %v1893
    %v1926 = vunpack.c.l.b16 %v1894
    %v1927 = vunpack.c.l.b16 %v1895
    %v1928 = vunpack.c.l.b16 %v1896
    %v1929 = vunpack.c.l.b16 %v1897
    %v1930 = vunpack.c.l.b16 %v1898
    %v1931 = vunpack.c.l.b16 %v1899
    %v1932 = vunpack.c.l.b16 %v1900
    %v1933 = vunpack.c.l.b16 %v1901
    %v1934 = vunpack.c.l.b16 %v1902
    %v1935 = vunpack.c.l.b16 %v1903
    %v1936 = vpack.c.b16 %v1921, %v1920
    %v1937 = vpack.c.b16 %v1923, %v1922
    %v1938 = vpack.c.b16 %v1925, %v1924
    %v1939 = vpack.c.b16 %v1927, %v1926
    %v1940 = vpack.c.b16 %v1929, %v1928
    %v1941 = vpack.c.b16 %v1931, %v1930
    %v1942 = vpack.c.b16 %v1933, %v1932
    %v1943 = vpack.c.b16 %v1935, %v1934
    %1952 = vmatprep.subr.bf16.mxu0 0
    %1953 = vmatpush1.bf16.msra.mxu0 %v1943
    %1954 = vmatprep.subr.bf16.mxu0 0
    %1955 = vmatpush1.bf16.msra.mxu0 %v1942
    %1956 = vmatprep.subr.bf16.mxu0 0
    %1957 = vmatpush1.bf16.msra.mxu0 %v1941
    %1958 = vmatprep.subr.bf16.mxu0 0
    %1959 = vmatpush1.bf16.msra.mxu0 %v1940
    %1960 = vmatprep.subr.bf16.mxu0 0
    %1961 = vmatpush1.bf16.msra.mxu0 %v1939
    %1962 = vmatprep.subr.bf16.mxu0 0
    %1963 = vmatpush1.bf16.msra.mxu0 %v1938
    %1964 = vmatprep.subr.bf16.mxu0 0
    %1965 = vmatpush1.bf16.msra.mxu0 %v1937
    %1966 = vmatprep.subr.bf16.mxu0 0
    %1967 = vmatpush1.bf16.msra.mxu0 %v1936
    %1968 = vmatprep.subr.bf16.mxu0 0
    %1969 = vmatpush2.bf16.msra.mxu0 0
    %1970 = vmatprep.subr.bf16.mxu0 0
    %1971 = vmatpush2.bf16.msra.mxu0 0
    %1972 = vmatprep.subr.bf16.mxu0 0
    %1973 = vmatpush2.bf16.msra.mxu0 0
    %1974 = vmatprep.subr.bf16.mxu0 0
    %1975 = vmatpush2.bf16.msra.mxu0 0
    %1976 = vmatprep.subr.bf16.mxu0 0
    %1977 = vmatpush2.bf16.msra.mxu0 0
    %1978 = vmatprep.subr.bf16.mxu0 0
    %1979 = vmatpush2.bf16.msra.mxu0 0
    %1980 = vmatprep.subr.bf16.mxu0 0
    %1981 = vmatpush2.bf16.msra.mxu0 0
    %1982 = vmatprep.subr.bf16.mxu0 0
    %1983 = vmatpush2.bf16.msra.mxu0 0
    %1984 = vmatprep.mubr.bf16.mxu0 0
    %1985 = vmatmul.mubr.bf16.gmra.mxu0 %v1887
    %v1986 = vpop.f32.mrf.mxu0
    %v1987 = vadd.f32 0.0, %v1986
    %v1988 = vpop.f32.mrf.mxu0
    %v1989 = vpop.f32.mrf.mxu0
    %v1990 = vpop.f32.mrf.mxu0
    %1991 = vdwg.mxu0
    %v1993 = vlaneseq
    %v1994 = vshrl.u32 %v1993, 7
    %v1995 = vsub.s32 0, %v1994
    %v1996 = vrot.slane %v1886, %v1995
    %v1998 = vadd.f32 %v1996, %v1987
    %s1999 = scalar_lea.vmem %s5, 64
    %v2000 = vld [vmem:[%s1999] sm:$0xf]
    %v2001 = vld [vmem:[%s1999 + $0x4] sm:$0xf]
    %v2002 = vld [vmem:[%s1999 + $0x8] sm:$0xf]
    %v2003 = vld [vmem:[%s1999 + $0xc] sm:$0xf]
    %v2004 = vld [vmem:[%s1999 + $0x10] sm:$0xf]
    %v2005 = vld [vmem:[%s1999 + $0x14] sm:$0xf]
    %v2006 = vld [vmem:[%s1999 + $0x18] sm:$0xf]
    %v2007 = vld [vmem:[%s1999 + $0x1c] sm:$0xf]
    %v2008 = vld [vmem:[%s1999 + $0x20] sm:$0xf]
    %v2009 = vld [vmem:[%s1999 + $0x24] sm:$0xf]
    %v2010 = vld [vmem:[%s1999 + $0x28] sm:$0xf]
    %v2011 = vld [vmem:[%s1999 + $0x2c] sm:$0xf]
    %v2012 = vld [vmem:[%s1999 + $0x30] sm:$0xf]
    %v2013 = vld [vmem:[%s1999 + $0x34] sm:$0xf]
    %v2014 = vld [vmem:[%s1999 + $0x38] sm:$0xf]
    %v2015 = vld [vmem:[%s1999 + $0x3c] sm:$0xf]
    %v2017 = vrot.slane %v1887, 1
    %v2035 = vunpack.c.l.b16 %v2000
    %v2036 = vunpack.c.l.b16 %v2001
    %v2037 = vunpack.c.l.b16 %v2002
    %v2038 = vunpack.c.l.b16 %v2003
    %v2039 = vunpack.c.l.b16 %v2004
    %v2040 = vunpack.c.l.b16 %v2005
    %v2041 = vunpack.c.l.b16 %v2006
    %v2042 = vunpack.c.l.b16 %v2007
    %v2043 = vunpack.c.l.b16 %v2008
    %v2044 = vunpack.c.l.b16 %v2009
    %v2045 = vunpack.c.l.b16 %v2010
    %v2046 = vunpack.c.l.b16 %v2011
    %v2047 = vunpack.c.l.b16 %v2012
    %v2048 = vunpack.c.l.b16 %v2013
    %v2049 = vunpack.c.l.b16 %v2014
    %v2050 = vunpack.c.l.b16 %v2015
    %v2051 = vpack.c.b16 %v2036, %v2035
    %v2052 = vpack.c.b16 %v2038, %v2037
    %v2053 = vpack.c.b16 %v2040, %v2039
    %v2054 = vpack.c.b16 %v2042, %v2041
    %v2055 = vpack.c.b16 %v2044, %v2043
    %v2056 = vpack.c.b16 %v2046, %v2045
    %v2057 = vpack.c.b16 %v2048, %v2047
    %v2058 = vpack.c.b16 %v2050, %v2049
    %2067 = vmatprep.subr.bf16.mxu0 0
    %2068 = vmatpush1.bf16.msra.mxu0 %v2058
    %2069 = vmatprep.subr.bf16.mxu0 0
    %2070 = vmatpush1.bf16.msra.mxu0 %v2057
    %2071 = vmatprep.subr.bf16.mxu0 0
    %2072 = vmatpush1.bf16.msra.mxu0 %v2056
    %2073 = vmatprep.subr.bf16.mxu0 0
    %2074 = vmatpush1.bf16.msra.mxu0 %v2055
    %2075 = vmatprep.subr.bf16.mxu0 0
    %2076 = vmatpush1.bf16.msra.mxu0 %v2054
    %2077 = vmatprep.subr.bf16.mxu0 0
    %2078 = vmatpush1.bf16.msra.mxu0 %v2053
    %2079 = vmatprep.subr.bf16.mxu0 0
    %2080 = vmatpush1.bf16.msra.mxu0 %v2052
    %2081 = vmatprep.subr.bf16.mxu0 0
    %2082 = vmatpush1.bf16.msra.mxu0 %v2051
    %2083 = vmatprep.subr.bf16.mxu0 0
    %2084 = vmatpush2.bf16.msra.mxu0 0
    %2085 = vmatprep.subr.bf16.mxu0 0
    %2086 = vmatpush2.bf16.msra.mxu0 0
    %2087 = vmatprep.subr.bf16.mxu0 0
    %2088 = vmatpush2.bf16.msra.mxu0 0
    %2089 = vmatprep.subr.bf16.mxu0 0
    %2090 = vmatpush2.bf16.msra.mxu0 0
    %2091 = vmatprep.subr.bf16.mxu0 0
    %2092 = vmatpush2.bf16.msra.mxu0 0
    %2093 = vmatprep.subr.bf16.mxu0 0
    %2094 = vmatpush2.bf16.msra.mxu0 0
    %2095 = vmatprep.subr.bf16.mxu0 0
    %2096 = vmatpush2.bf16.msra.mxu0 0
    %2097 = vmatprep.subr.bf16.mxu0 0
    %2098 = vmatpush2.bf16.msra.mxu0 0
    %2099 = vmatprep.mubr.bf16.mxu0 0
    %2100 = vmatmul.mubr.bf16.gmra.mxu0 %v2017
    %v2101 = vpop.f32.mrf.mxu0
    %v2102 = vadd.f32 0.0, %v2101
    %v2103 = vpop.f32.mrf.mxu0
    %v2104 = vpop.f32.mrf.mxu0
    %v2105 = vpop.f32.mrf.mxu0
    %2106 = vdwg.mxu0
    %v2107 = vadd.f32 %v1998, %v2102
    %s2108 = scalar_lea.vmem %s5, 128
    %v2109 = vld [vmem:[%s2108] sm:$0xf]
    %v2110 = vld [vmem:[%s2108 + $0x4] sm:$0xf]
    %v2111 = vld [vmem:[%s2108 + $0x8] sm:$0xf]
    %v2112 = vld [vmem:[%s2108 + $0xc] sm:$0xf]
    %v2113 = vld [vmem:[%s2108 + $0x10] sm:$0xf]
    %v2114 = vld [vmem:[%s2108 + $0x14] sm:$0xf]
    %v2115 = vld [vmem:[%s2108 + $0x18] sm:$0xf]
    %v2116 = vld [vmem:[%s2108 + $0x1c] sm:$0xf]
    %v2117 = vld [vmem:[%s2108 + $0x20] sm:$0xf]
    %v2118 = vld [vmem:[%s2108 + $0x24] sm:$0xf]
    %v2119 = vld [vmem:[%s2108 + $0x28] sm:$0xf]
    %v2120 = vld [vmem:[%s2108 + $0x2c] sm:$0xf]
    %v2121 = vld [vmem:[%s2108 + $0x30] sm:$0xf]
    %v2122 = vld [vmem:[%s2108 + $0x34] sm:$0xf]
    %v2123 = vld [vmem:[%s2108 + $0x38] sm:$0xf]
    %v2124 = vld [vmem:[%s2108 + $0x3c] sm:$0xf]
    %v2125 = vrot.slane %v1887, 2
    %v2143 = vunpack.c.l.b16 %v2109
    %v2144 = vunpack.c.l.b16 %v2110
    %v2145 = vunpack.c.l.b16 %v2111
    %v2146 = vunpack.c.l.b16 %v2112
    %v2147 = vunpack.c.l.b16 %v2113
    %v2148 = vunpack.c.l.b16 %v2114
    %v2149 = vunpack.c.l.b16 %v2115
    %v2150 = vunpack.c.l.b16 %v2116
    %v2151 = vunpack.c.l.b16 %v2117
    %v2152 = vunpack.c.l.b16 %v2118
    %v2153 = vunpack.c.l.b16 %v2119
    %v2154 = vunpack.c.l.b16 %v2120
    %v2155 = vunpack.c.l.b16 %v2121
    %v2156 = vunpack.c.l.b16 %v2122
    %v2157 = vunpack.c.l.b16 %v2123
    %v2158 = vunpack.c.l.b16 %v2124
    %v2159 = vpack.c.b16 %v2144, %v2143
    %v2160 = vpack.c.b16 %v2146, %v2145
    %v2161 = vpack.c.b16 %v2148, %v2147
    %v2162 = vpack.c.b16 %v2150, %v2149
    %v2163 = vpack.c.b16 %v2152, %v2151
    %v2164 = vpack.c.b16 %v2154, %v2153
    %v2165 = vpack.c.b16 %v2156, %v2155
    %v2166 = vpack.c.b16 %v2158, %v2157
    %2175 = vmatprep.subr.bf16.mxu0 0
    %2176 = vmatpush1.bf16.msra.mxu0 %v2166
    %2177 = vmatprep.subr.bf16.mxu0 0
    %2178 = vmatpush1.bf16.msra.mxu0 %v2165
    %2179 = vmatprep.subr.bf16.mxu0 0
    %2180 = vmatpush1.bf16.msra.mxu0 %v2164
    %2181 = vmatprep.subr.bf16.mxu0 0
    %2182 = vmatpush1.bf16.msra.mxu0 %v2163
    %2183 = vmatprep.subr.bf16.mxu0 0
    %2184 = vmatpush1.bf16.msra.mxu0 %v2162
    %2185 = vmatprep.subr.bf16.mxu0 0
    %2186 = vmatpush1.bf16.msra.mxu0 %v2161
    %2187 = vmatprep.subr.bf16.mxu0 0
    %2188 = vmatpush1.bf16.msra.mxu0 %v2160
    %2189 = vmatprep.subr.bf16.mxu0 0
    %2190 = vmatpush1.bf16.msra.mxu0 %v2159
    %2191 = vmatprep.subr.bf16.mxu0 0
    %2192 = vmatpush2.bf16.msra.mxu0 0
    %2193 = vmatprep.subr.bf16.mxu0 0
    %2194 = vmatpush2.bf16.msra.mxu0 0
    %2195 = vmatprep.subr.bf16.mxu0 0
    %2196 = vmatpush2.bf16.msra.mxu0 0
    %2197 = vmatprep.subr.bf16.mxu0 0
    %2198 = vmatpush2.bf16.msra.mxu0 0
    %2199 = vmatprep.subr.bf16.mxu0 0
    %2200 = vmatpush2.bf16.msra.mxu0 0
    %2201 = vmatprep.subr.bf16.mxu0 0
    %2202 = vmatpush2.bf16.msra.mxu0 0
    %2203 = vmatprep.subr.bf16.mxu0 0
    %2204 = vmatpush2.bf16.msra.mxu0 0
    %2205 = vmatprep.subr.bf16.mxu0 0
    %2206 = vmatpush2.bf16.msra.mxu0 0
    %2207 = vmatprep.mubr.bf16.mxu0 0
    %2208 = vmatmul.mubr.bf16.gmra.mxu0 %v2125
    %v2209 = vpop.f32.mrf.mxu0
    %v2210 = vadd.f32 0.0, %v2209
    %v2211 = vpop.f32.mrf.mxu0
    %v2212 = vpop.f32.mrf.mxu0
    %v2213 = vpop.f32.mrf.mxu0
    %2214 = vdwg.mxu0
    %v2215 = vadd.f32 %v2107, %v2210
    %s2216 = scalar_lea.vmem %s5, 192
    %v2217 = vld [vmem:[%s2216] sm:$0xf]
    %v2218 = vld [vmem:[%s2216 + $0x4] sm:$0xf]
    %v2219 = vld [vmem:[%s2216 + $0x8] sm:$0xf]
    %v2220 = vld [vmem:[%s2216 + $0xc] sm:$0xf]
    %v2221 = vld [vmem:[%s2216 + $0x10] sm:$0xf]
    %v2222 = vld [vmem:[%s2216 + $0x14] sm:$0xf]
    %v2223 = vld [vmem:[%s2216 + $0x18] sm:$0xf]
    %v2224 = vld [vmem:[%s2216 + $0x1c] sm:$0xf]
    %v2225 = vld [vmem:[%s2216 + $0x20] sm:$0xf]
    %v2226 = vld [vmem:[%s2216 + $0x24] sm:$0xf]
    %v2227 = vld [vmem:[%s2216 + $0x28] sm:$0xf]
    %v2228 = vld [vmem:[%s2216 + $0x2c] sm:$0xf]
    %v2229 = vld [vmem:[%s2216 + $0x30] sm:$0xf]
    %v2230 = vld [vmem:[%s2216 + $0x34] sm:$0xf]
    %v2231 = vld [vmem:[%s2216 + $0x38] sm:$0xf]
    %v2232 = vld [vmem:[%s2216 + $0x3c] sm:$0xf]
    %v2233 = vrot.slane %v1887, 3
    %v2251 = vunpack.c.l.b16 %v2217
    %v2252 = vunpack.c.l.b16 %v2218
    %v2253 = vunpack.c.l.b16 %v2219
    %v2254 = vunpack.c.l.b16 %v2220
    %v2255 = vunpack.c.l.b16 %v2221
    %v2256 = vunpack.c.l.b16 %v2222
    %v2257 = vunpack.c.l.b16 %v2223
    %v2258 = vunpack.c.l.b16 %v2224
    %v2259 = vunpack.c.l.b16 %v2225
    %v2260 = vunpack.c.l.b16 %v2226
    %v2261 = vunpack.c.l.b16 %v2227
    %v2262 = vunpack.c.l.b16 %v2228
    %v2263 = vunpack.c.l.b16 %v2229
    %v2264 = vunpack.c.l.b16 %v2230
    %v2265 = vunpack.c.l.b16 %v2231
    %v2266 = vunpack.c.l.b16 %v2232
    %v2267 = vpack.c.b16 %v2252, %v2251
    %v2268 = vpack.c.b16 %v2254, %v2253
    %v2269 = vpack.c.b16 %v2256, %v2255
    %v2270 = vpack.c.b16 %v2258, %v2257
    %v2271 = vpack.c.b16 %v2260, %v2259
    %v2272 = vpack.c.b16 %v2262, %v2261
    %v2273 = vpack.c.b16 %v2264, %v2263
    %v2274 = vpack.c.b16 %v2266, %v2265
    %2283 = vmatprep.subr.bf16.mxu0 0
    %2284 = vmatpush1.bf16.msra.mxu0 %v2274
    %2285 = vmatprep.subr.bf16.mxu0 0
    %2286 = vmatpush1.bf16.msra.mxu0 %v2273
    %2287 = vmatprep.subr.bf16.mxu0 0
    %2288 = vmatpush1.bf16.msra.mxu0 %v2272
    %2289 = vmatprep.subr.bf16.mxu0 0
    %2290 = vmatpush1.bf16.msra.mxu0 %v2271
    %2291 = vmatprep.subr.bf16.mxu0 0
    %2292 = vmatpush1.bf16.msra.mxu0 %v2270
    %2293 = vmatprep.subr.bf16.mxu0 0
    %2294 = vmatpush1.bf16.msra.mxu0 %v2269
    %2295 = vmatprep.subr.bf16.mxu0 0
    %2296 = vmatpush1.bf16.msra.mxu0 %v2268
    %2297 = vmatprep.subr.bf16.mxu0 0
    %2298 = vmatpush1.bf16.msra.mxu0 %v2267
    %2299 = vmatprep.subr.bf16.mxu0 0
    %2300 = vmatpush2.bf16.msra.mxu0 0
    %2301 = vmatprep.subr.bf16.mxu0 0
    %2302 = vmatpush2.bf16.msra.mxu0 0
    %2303 = vmatprep.subr.bf16.mxu0 0
    %2304 = vmatpush2.bf16.msra.mxu0 0
    %2305 = vmatprep.subr.bf16.mxu0 0
    %2306 = vmatpush2.bf16.msra.mxu0 0
    %2307 = vmatprep.subr.bf16.mxu0 0
    %2308 = vmatpush2.bf16.msra.mxu0 0
    %2309 = vmatprep.subr.bf16.mxu0 0
    %2310 = vmatpush2.bf16.msra.mxu0 0
    %2311 = vmatprep.subr.bf16.mxu0 0
    %2312 = vmatpush2.bf16.msra.mxu0 0
    %2313 = vmatprep.subr.bf16.mxu0 0
    %2314 = vmatpush2.bf16.msra.mxu0 0
    %2315 = vmatprep.mubr.bf16.mxu0 0
    %2316 = vmatmul.mubr.bf16.gmra.mxu0 %v2233
    %v2317 = vpop.f32.mrf.mxu0
    %v2318 = vadd.f32 0.0, %v2317
    %v2319 = vpop.f32.mrf.mxu0
    %v2320 = vpop.f32.mrf.mxu0
    %v2321 = vpop.f32.mrf.mxu0
    %2322 = vdwg.mxu0
    %v2323 = vadd.f32 %v2215, %v2318
    %v2324 = vpack.c.bf16 %v1885, %v1885
    %s2325 = scalar_lea.vmem %s5, 256
    %v2326 = vld [vmem:[%s2325] sm:$0xf]
    %v2327 = vld [vmem:[%s2325 + $0x4] sm:$0xf]
    %v2328 = vld [vmem:[%s2325 + $0x8] sm:$0xf]
    %v2329 = vld [vmem:[%s2325 + $0xc] sm:$0xf]
    %v2330 = vld [vmem:[%s2325 + $0x10] sm:$0xf]
    %v2331 = vld [vmem:[%s2325 + $0x14] sm:$0xf]
    %v2332 = vld [vmem:[%s2325 + $0x18] sm:$0xf]
    %v2333 = vld [vmem:[%s2325 + $0x1c] sm:$0xf]
    %v2334 = vld [vmem:[%s2325 + $0x20] sm:$0xf]
    %v2335 = vld [vmem:[%s2325 + $0x24] sm:$0xf]
    %v2336 = vld [vmem:[%s2325 + $0x28] sm:$0xf]
    %v2337 = vld [vmem:[%s2325 + $0x2c] sm:$0xf]
    %v2338 = vld [vmem:[%s2325 + $0x30] sm:$0xf]
    %v2339 = vld [vmem:[%s2325 + $0x34] sm:$0xf]
    %v2340 = vld [vmem:[%s2325 + $0x38] sm:$0xf]
    %v2341 = vld [vmem:[%s2325 + $0x3c] sm:$0xf]
    %v2358 = vunpack.c.l.b16 %v2326
    %v2359 = vunpack.c.l.b16 %v2327
    %v2360 = vunpack.c.l.b16 %v2328
    %v2361 = vunpack.c.l.b16 %v2329
    %v2362 = vunpack.c.l.b16 %v2330
    %v2363 = vunpack.c.l.b16 %v2331
    %v2364 = vunpack.c.l.b16 %v2332
    %v2365 = vunpack.c.l.b16 %v2333
    %v2366 = vunpack.c.l.b16 %v2334
    %v2367 = vunpack.c.l.b16 %v2335
    %v2368 = vunpack.c.l.b16 %v2336
    %v2369 = vunpack.c.l.b16 %v2337
    %v2370 = vunpack.c.l.b16 %v2338
    %v2371 = vunpack.c.l.b16 %v2339
    %v2372 = vunpack.c.l.b16 %v2340
    %v2373 = vunpack.c.l.b16 %v2341
    %v2374 = vpack.c.b16 %v2359, %v2358
    %v2375 = vpack.c.b16 %v2361, %v2360
    %v2376 = vpack.c.b16 %v2363, %v2362
    %v2377 = vpack.c.b16 %v2365, %v2364
    %v2378 = vpack.c.b16 %v2367, %v2366
    %v2379 = vpack.c.b16 %v2369, %v2368
    %v2380 = vpack.c.b16 %v2371, %v2370
    %v2381 = vpack.c.b16 %v2373, %v2372
    %2390 = vmatprep.subr.bf16.mxu0 0
    %2391 = vmatpush1.bf16.msra.mxu0 %v2381
    %2392 = vmatprep.subr.bf16.mxu0 0
    %2393 = vmatpush1.bf16.msra.mxu0 %v2380
    %2394 = vmatprep.subr.bf16.mxu0 0
    %2395 = vmatpush1.bf16.msra.mxu0 %v2379
    %2396 = vmatprep.subr.bf16.mxu0 0
    %2397 = vmatpush1.bf16.msra.mxu0 %v2378
    %2398 = vmatprep.subr.bf16.mxu0 0
    %2399 = vmatpush1.bf16.msra.mxu0 %v2377
    %2400 = vmatprep.subr.bf16.mxu0 0
    %2401 = vmatpush1.bf16.msra.mxu0 %v2376
    %2402 = vmatprep.subr.bf16.mxu0 0
    %2403 = vmatpush1.bf16.msra.mxu0 %v2375
    %2404 = vmatprep.subr.bf16.mxu0 0
    %2405 = vmatpush1.bf16.msra.mxu0 %v2374
    %2406 = vmatprep.subr.bf16.mxu0 0
    %2407 = vmatpush2.bf16.msra.mxu0 0
    %2408 = vmatprep.subr.bf16.mxu0 0
    %2409 = vmatpush2.bf16.msra.mxu0 0
    %2410 = vmatprep.subr.bf16.mxu0 0
    %2411 = vmatpush2.bf16.msra.mxu0 0
    %2412 = vmatprep.subr.bf16.mxu0 0
    %2413 = vmatpush2.bf16.msra.mxu0 0
    %2414 = vmatprep.subr.bf16.mxu0 0
    %2415 = vmatpush2.bf16.msra.mxu0 0
    %2416 = vmatprep.subr.bf16.mxu0 0
    %2417 = vmatpush2.bf16.msra.mxu0 0
    %2418 = vmatprep.subr.bf16.mxu0 0
    %2419 = vmatpush2.bf16.msra.mxu0 0
    %2420 = vmatprep.subr.bf16.mxu0 0
    %2421 = vmatpush2.bf16.msra.mxu0 0
    %2422 = vmatprep.mubr.bf16.mxu0 0
    %2423 = vmatmul.mubr.bf16.gmra.mxu0 %v2324
    %v2424 = vpop.f32.mrf.mxu0
    %v2425 = vadd.f32 0.0, %v2424
    %v2426 = vpop.f32.mrf.mxu0
    %v2427 = vpop.f32.mrf.mxu0
    %v2428 = vpop.f32.mrf.mxu0
    %2429 = vdwg.mxu0
    %v2430 = vadd.f32 %v2323, %v2425
    %v2431 = vmax.f32 %v2430, 0.0
    %v2432 = vpack.c.bf16 %v2431, %v2431
    %v2433 = vld [vmem:[%s7] sm:$0xf]
    %v2434 = vld [vmem:[%s7 + $0x4] sm:$0xf]
    %v2435 = vld [vmem:[%s7 + $0x8] sm:$0xf]
    %v2436 = vld [vmem:[%s7 + $0xc] sm:$0xf]
    %v2437 = vld [vmem:[%s7 + $0x10] sm:$0xf]
    %v2438 = vld [vmem:[%s7 + $0x14] sm:$0xf]
    %v2439 = vld [vmem:[%s7 + $0x18] sm:$0xf]
    %v2440 = vld [vmem:[%s7 + $0x1c] sm:$0xf]
    %v2441 = vld [vmem:[%s7 + $0x20] sm:$0xf]
    %v2442 = vld [vmem:[%s7 + $0x24] sm:$0xf]
    %v2443 = vld [vmem:[%s7 + $0x28] sm:$0xf]
    %v2444 = vld [vmem:[%s7 + $0x2c] sm:$0xf]
    %v2445 = vld [vmem:[%s7 + $0x30] sm:$0xf]
    %v2446 = vld [vmem:[%s7 + $0x34] sm:$0xf]
    %v2447 = vld [vmem:[%s7 + $0x38] sm:$0xf]
    %v2448 = vld [vmem:[%s7 + $0x3c] sm:$0xf]
    %v2449 = vld [vmem:[%s8] sm:$0x1]
    %v2451 = vlaneseq
    %v2452 = vshrl.u32 %v2451, 7
    %v2453 = vsub.s32 0, %v2452
    %v2454 = vrot.slane %v2449, %v2453
    %v2472 = vunpack.c.l.b16 %v2433
    %v2473 = vunpack.c.l.b16 %v2434
    %v2474 = vunpack.c.l.b16 %v2435
    %v2475 = vunpack.c.l.b16 %v2436
    %v2476 = vunpack.c.l.b16 %v2437
    %v2477 = vunpack.c.l.b16 %v2438
    %v2478 = vunpack.c.l.b16 %v2439
    %v2479 = vunpack.c.l.b16 %v2440
    %v2480 = vunpack.c.l.b16 %v2441
    %v2481 = vunpack.c.l.b16 %v2442
    %v2482 = vunpack.c.l.b16 %v2443
    %v2483 = vunpack.c.l.b16 %v2444
    %v2484 = vunpack.c.l.b16 %v2445
    %v2485 = vunpack.c.l.b16 %v2446
    %v2486 = vunpack.c.l.b16 %v2447
    %v2487 = vunpack.c.l.b16 %v2448
    %v2488 = vpack.c.b16 %v2473, %v2472
    %v2489 = vpack.c.b16 %v2475, %v2474
    %v2490 = vpack.c.b16 %v2477, %v2476
    %v2491 = vpack.c.b16 %v2479, %v2478
    %v2492 = vpack.c.b16 %v2481, %v2480
    %v2493 = vpack.c.b16 %v2483, %v2482
    %v2494 = vpack.c.b16 %v2485, %v2484
    %v2495 = vpack.c.b16 %v2487, %v2486
    %2504 = vmatprep.subr.bf16.mxu0 0
    %2505 = vmatpush1.bf16.msra.mxu0 %v2495
    %2506 = vmatprep.subr.bf16.mxu0 0
    %2507 = vmatpush1.bf16.msra.mxu0 %v2494
    %2508 = vmatprep.subr.bf16.mxu0 0
    %2509 = vmatpush1.bf16.msra.mxu0 %v2493
    %2510 = vmatprep.subr.bf16.mxu0 0
    %2511 = vmatpush1.bf16.msra.mxu0 %v2492
    %2512 = vmatprep.subr.bf16.mxu0 0
    %2513 = vmatpush1.bf16.msra.mxu0 %v2491
    %2514 = vmatprep.subr.bf16.mxu0 0
    %2515 = vmatpush1.bf16.msra.mxu0 %v2490
    %2516 = vmatprep.subr.bf16.mxu0 0
    %2517 = vmatpush1.bf16.msra.mxu0 %v2489
    %2518 = vmatprep.subr.bf16.mxu0 0
    %2519 = vmatpush1.bf16.msra.mxu0 %v2488
    %2520 = vmatprep.subr.bf16.mxu0 0
    %2521 = vmatpush2.bf16.msra.mxu0 0
    %2522 = vmatprep.subr.bf16.mxu0 0
    %2523 = vmatpush2.bf16.msra.mxu0 0
    %2524 = vmatprep.subr.bf16.mxu0 0
    %2525 = vmatpush2.bf16.msra.mxu0 0
    %2526 = vmatprep.subr.bf16.mxu0 0
    %2527 = vmatpush2.bf16.msra.mxu0 0
    %2528 = vmatprep.subr.bf16.mxu0 0
    %2529 = vmatpush2.bf16.msra.mxu0 0
    %2530 = vmatprep.subr.bf16.mxu0 0
    %2531 = vmatpush2.bf16.msra.mxu0 0
    %2532 = vmatprep.subr.bf16.mxu0 0
    %2533 = vmatpush2.bf16.msra.mxu0 0
    %2534 = vmatprep.subr.bf16.mxu0 0
    %2535 = vmatpush2.bf16.msra.mxu0 0
    %2536 = vmatprep.mubr.bf16.mxu0 0
    %2537 = vmatmul.mubr.bf16.gmra.mxu0 %v2432
    %v2538 = vpop.f32.mrf.mxu0
    %v2539 = vadd.f32 %v2454, %v2538
    %v2540 = vpop.f32.mrf.mxu0
    %v2541 = vpop.f32.mrf.mxu0
    %v2542 = vpop.f32.mrf.mxu0
    %2543 = vdwg.mxu0
    %v2544 = vmax.f32 %v2539, 0.0
    %v2545 = vpack.c.bf16 %v2544, %v2544
    %v2546 = vld [vmem:[%s9] sm:$0xf]
    %v2547 = vld [vmem:[%s9 + $0x4] sm:$0xf]
    %v2548 = vld [vmem:[%s9 + $0x8] sm:$0xf]
    %v2549 = vld [vmem:[%s9 + $0xc] sm:$0xf]
    %v2550 = vld [vmem:[%s9 + $0x10] sm:$0xf]
    %v2551 = vld [vmem:[%s9 + $0x14] sm:$0xf]
    %v2552 = vld [vmem:[%s9 + $0x18] sm:$0xf]
    %v2553 = vld [vmem:[%s9 + $0x1c] sm:$0xf]
    %v2554 = vld [vmem:[%s9 + $0x20] sm:$0xf]
    %v2555 = vld [vmem:[%s9 + $0x24] sm:$0xf]
    %v2556 = vld [vmem:[%s9 + $0x28] sm:$0xf]
    %v2557 = vld [vmem:[%s9 + $0x2c] sm:$0xf]
    %v2558 = vld [vmem:[%s9 + $0x30] sm:$0xf]
    %v2559 = vld [vmem:[%s9 + $0x34] sm:$0xf]
    %v2560 = vld [vmem:[%s9 + $0x38] sm:$0xf]
    %v2561 = vld [vmem:[%s9 + $0x3c] sm:$0xf]
    %v2562 = vld [vmem:[%s10] sm:$0x1]
    %v2564 = vlaneseq
    %v2565 = vshrl.u32 %v2564, 7
    %v2566 = vsub.s32 0, %v2565
    %v2567 = vrot.slane %v2562, %v2566
    %v2585 = vunpack.c.l.b16 %v2546
    %v2586 = vunpack.c.l.b16 %v2547
    %v2587 = vunpack.c.l.b16 %v2548
    %v2588 = vunpack.c.l.b16 %v2549
    %v2589 = vunpack.c.l.b16 %v2550
    %v2590 = vunpack.c.l.b16 %v2551
    %v2591 = vunpack.c.l.b16 %v2552
    %v2592 = vunpack.c.l.b16 %v2553
    %v2593 = vunpack.c.l.b16 %v2554
    %v2594 = vunpack.c.l.b16 %v2555
    %v2595 = vunpack.c.l.b16 %v2556
    %v2596 = vunpack.c.l.b16 %v2557
    %v2597 = vunpack.c.l.b16 %v2558
    %v2598 = vunpack.c.l.b16 %v2559
    %v2599 = vunpack.c.l.b16 %v2560
    %v2600 = vunpack.c.l.b16 %v2561
    %v2601 = vpack.c.b16 %v2586, %v2585
    %v2602 = vpack.c.b16 %v2588, %v2587
    %v2603 = vpack.c.b16 %v2590, %v2589
    %v2604 = vpack.c.b16 %v2592, %v2591
    %v2605 = vpack.c.b16 %v2594, %v2593
    %v2606 = vpack.c.b16 %v2596, %v2595
    %v2607 = vpack.c.b16 %v2598, %v2597
    %v2608 = vpack.c.b16 %v2600, %v2599
    %2617 = vmatprep.subr.bf16.mxu0 0
    %2618 = vmatpush1.bf16.msra.mxu0 %v2608
    %2619 = vmatprep.subr.bf16.mxu0 0
    %2620 = vmatpush1.bf16.msra.mxu0 %v2607
    %2621 = vmatprep.subr.bf16.mxu0 0
    %2622 = vmatpush1.bf16.msra.mxu0 %v2606
    %2623 = vmatprep.subr.bf16.mxu0 0
    %2624 = vmatpush1.bf16.msra.mxu0 %v2605
    %2625 = vmatprep.subr.bf16.mxu0 0
    %2626 = vmatpush1.bf16.msra.mxu0 %v2604
    %2627 = vmatprep.subr.bf16.mxu0 0
    %2628 = vmatpush1.bf16.msra.mxu0 %v2603
    %2629 = vmatprep.subr.bf16.mxu0 0
    %2630 = vmatpush1.bf16.msra.mxu0 %v2602
    %2631 = vmatprep.subr.bf16.mxu0 0
    %2632 = vmatpush1.bf16.msra.mxu0 %v2601
    %2633 = vmatprep.subr.bf16.mxu0 0
    %2634 = vmatpush2.bf16.msra.mxu0 0
    %2635 = vmatprep.subr.bf16.mxu0 0
    %2636 = vmatpush2.bf16.msra.mxu0 0
    %2637 = vmatprep.subr.bf16.mxu0 0
    %2638 = vmatpush2.bf16.msra.mxu0 0
    %2639 = vmatprep.subr.bf16.mxu0 0
    %2640 = vmatpush2.bf16.msra.mxu0 0
    %2641 = vmatprep.subr.bf16.mxu0 0
    %2642 = vmatpush2.bf16.msra.mxu0 0
    %2643 = vmatprep.subr.bf16.mxu0 0
    %2644 = vmatpush2.bf16.msra.mxu0 0
    %2645 = vmatprep.subr.bf16.mxu0 0
    %2646 = vmatpush2.bf16.msra.mxu0 0
    %2647 = vmatprep.subr.bf16.mxu0 0
    %2648 = vmatpush2.bf16.msra.mxu0 0
    %2649 = vmatprep.mubr.bf16.mxu0 0
    %2650 = vmatmul.mubr.bf16.gmra.mxu0 %v2545
    %v2651 = vpop.f32.mrf.mxu0
    %v2652 = vadd.f32 %v2567, %v2651
    %v2653 = vpop.f32.mrf.mxu0
    %v2654 = vpop.f32.mrf.mxu0
    %v2655 = vpop.f32.mrf.mxu0
    %2656 = vdwg.mxu0
    %2657 = vst [vmem:[#allocation4] sm:$0x3] %v2652
    // Predicated region
    $region46: #{net_forward.1} parent=1 // pred_check
      _
    $region47: #{net_forward.1} parent=1 // pred_check_branch
      %2659 = sbr.rel (0) target = $region49
    $region48: #{net_forward.1} parent=1 // pred_region
      %s2661 = ssub.s32 32, 32
      %2662 = vsyncadd [#allocation5], %s2661
      %s2664 = sshll.u32 [#allocation4], 4
      %s2665 = int_to_ptr.vmem [resolvable:$true] %s2664
      %2667 = dma.vmem_to_hbm [thread:$0]  %s2665, 32, %s11, [#allocation5]
    $region49: #{net_forward.1} parent=1 // pred_fallthru
      _
    // Predicated region
    $region50: #{net_forward.1} parent=1 // pred_check
      _
    $region51: #{net_forward.1} parent=1 // pred_check_branch
      %2669 = sbr.rel (0) target = $region53
    $region52: #{net_forward.1} parent=1 // pred_region
      %2670 = dma.done [#allocation5], 32
    $region53: #{net_forward.1} parent=1 // pred_fallthru
      _
    %2671 = vsyncpa [#allocation5], 1

</llo_original>
